<compile_context>
chip_gen: v7x
topology: tpu7x:2x2x1
jax: 0.10.0
libtpu: 0.0.40
codegen_flags: <defaults>
</compile_context>

<pallas_src>
import functools
import numpy as np
import jax
import jax.numpy as jnp
from jax.experimental import pallas as pl
from jax.experimental.pallas import tpu as pltpu


# ----------------------------------------------------------------------------
# Parameter / embedding setup (plain JAX / numpy glue)
# ----------------------------------------------------------------------------
def pos_sinusoid_embedding(seq_len, d_model):
    emb = np.zeros((seq_len, d_model), dtype=np.float32)
    pos = np.arange(seq_len, dtype=np.float32)
    for i in range(d_model):
        f = np.sin if i % 2 == 0 else np.cos
        emb[:, i] = f(pos / np.power(10000.0, 2 * (i // 2) / d_model))
    return jnp.asarray(emb, dtype=jnp.float32)


def init_layer_params(key, d_model, num_heads, dff):
    assert d_model % num_heads == 0
    ks = jax.random.split(key, 8)
    n = lambda k, shape, s=0.05: (s * jax.random.normal(k, shape)).astype(jnp.float32)
    z = lambda shape: jnp.zeros(shape, jnp.float32)
    o = lambda shape: jnp.ones(shape, jnp.float32)
    return dict(
        wq=n(ks[0], (d_model, d_model)), bq=z((1, d_model)),
        wk=n(ks[1], (d_model, d_model)), bk=z((1, d_model)),
        wv=n(ks[2], (d_model, d_model)), bv=z((1, d_model)),
        wo=n(ks[3], (d_model, d_model)), bo=z((1, d_model)),
        g1=o((1, d_model)), be1=z((1, d_model)),
        w1=n(ks[4], (d_model, dff)),     b1=z((1, dff)),
        w2=n(ks[5], (dff, d_model)),     b2=z((1, d_model)),
        g2=o((1, d_model)), be2=z((1, d_model)),
    )


def init_params(key, num_layers, d_model, num_heads, dff):
    return [init_layer_params(jax.random.fold_in(key, i), d_model, num_heads, dff)
            for i in range(num_layers)]


def stack_params(layer_params, num_heads):
    """Stack per-layer params on a leading L axis:
       * wq/wk/wv fused column-wise into one (L, D, 3D) weight, with the
         1/sqrt(d_head) scale folded into the Q columns / bias (host-side).
       * wo pre-split per head into (L, H, dh, D) so the kernel indexes whole
         (dh, D) slabs with zero in-kernel slicing cost.
       * the remaining small vectors packed into one (L, 8, max(D, dff))
         tensor -> a single DMA per layer step instead of ten."""
    L = len(layer_params)
    D = layer_params[0]["wq"].shape[0]
    dff = layer_params[0]["w1"].shape[1]
    H = num_heads
    dh = D // H
    scale = 1.0 / float(np.sqrt(dh))
    g = lambda name: jnp.stack([p[name] for p in layer_params])      # (L, ...)

    wqkv = jnp.concatenate([g("wq") * scale, g("wk"), g("wv")], axis=-1)  # (L,D,3D)
    bqkv = jnp.concatenate([g("bq") * scale, g("bk"), g("bv")], axis=-1)  # (L,1,3D)
    wo = g("wo").reshape(L, H, dh, D)                                     # (L,H,dh,D)

    Dmax = max(D, dff)

    def padv(v):                                  # (L, 1, n) -> (L, 1, Dmax)
        n = v.shape[-1]
        return jnp.pad(v, ((0, 0), (0, 0), (0, Dmax - n))) if n < Dmax else v

    vecs = jnp.concatenate(
        [padv(g(k)) for k in ("bo", "g1", "be1", "b1", "b2", "g2", "be2")]
        + [jnp.zeros((L, 1, Dmax), jnp.float32)],                     # pad to 8 rows
        axis=1)                                                       # (L, 8, Dmax)

    return dict(wqkv=wqkv, bqkv=bqkv, wo=wo, w1=g("w1"), w2=g("w2"), vecs=vecs)


# ----------------------------------------------------------------------------
# Fused encoder kernel: grid = (batch_tiles, layer); activation resident in o_ref
# ----------------------------------------------------------------------------
def encoder_stack_kernel(x_ref, pos_ref, wqkv_ref, bqkv_ref, wo_ref,
                         w1_ref, w2_ref, vec_ref, o_ref,
                         *, num_heads, d_head, d_ff, eps=1e-5):
    l = pl.program_id(1)

    # Layer 0: initialise the resident activation with X + pos_emb (fused).
    @pl.when(l == 0)
    def _init():
        o_ref[...] = x_ref[...] + pos_ref[...]

    Bt, S, D = o_ref.shape
    H, dh, dff = num_heads, d_head, d_ff
    M = Bt * S

    x = o_ref[...]                                 # (Bt, S, D) in VMEM
    xf = x.reshape(M, D)                           # flat rows for all matmuls

    vecs = vec_ref[0]                              # (8, max(D, dff))
    bo, g1, be1 = vecs[0:1, :D], vecs[1:2, :D], vecs[2:3, :D]
    b1 = vecs[3:4, :dff]
    b2, g2, be2 = vecs[4:5, :D], vecs[5:6, :D], vecs[6:7, :D]

    # ---- fused QKV projection: one (M,D)@(D,3D) MXU matmul (scale folded) ----
    qkv = jnp.dot(xf, wqkv_ref[0], preferred_element_type=jnp.float32) + bqkv_ref[0]

    # ---- per-head attention; head reduction accumulated into one (M,D) ----
    attn = None
    for h in range(H):                             # static unroll, H small
        q = qkv[:,         h * dh:        (h + 1) * dh].reshape(Bt, S, dh)
        k = qkv[:,     D + h * dh:    D + (h + 1) * dh].reshape(Bt, S, dh)
        v = qkv[:, 2 * D + h * dh:2 * D + (h + 1) * dh].reshape(Bt, S, dh)
        s = jnp.einsum('bqe,bke->bqk', q, k,
                       preferred_element_type=jnp.float32)            # (Bt,S,S)
        s = s - jnp.max(s, axis=-1, keepdims=True)                    # stable
        p = jnp.exp(s)
        p = p * pl.reciprocal(jnp.sum(p, axis=-1, keepdims=True), approx=True)
        ctx = jnp.einsum('bqk,bke->bqe', p, v,
                         preferred_element_type=jnp.float32)          # (Bt,S,dh)
        contrib = jnp.dot(ctx.reshape(M, dh), wo_ref[0, h],
                          preferred_element_type=jnp.float32)         # (M, D)
        attn = contrib if attn is None else attn + contrib
    attn = attn + bo

    # ---- residual + LayerNorm 1 (single-pass stats) ----
    y = xf + attn
    mu = jnp.mean(y, axis=-1, keepdims=True)
    var = jnp.mean(y * y, axis=-1, keepdims=True) - mu * mu
    y = (y - mu) * jax.lax.rsqrt(var + eps) * g1 + be1

    # ---- position-wise FFN (Conv1d kernel=1 == Linear) ----
    h1 = jnp.maximum(
        jnp.dot(y, w1_ref[0], preferred_element_type=jnp.float32) + b1, 0.0)
    f = jnp.dot(h1, w2_ref[0], preferred_element_type=jnp.float32) + b2

    # ---- residual + LayerNorm 2 (single-pass stats) ----
    z = y + f
    mu2 = jnp.mean(z, axis=-1, keepdims=True)
    var2 = jnp.mean(z * z, axis=-1, keepdims=True) - mu2 * mu2
    z = (z - mu2) * jax.lax.rsqrt(var2 + eps) * g2 + be2

    o_ref[...] = z.reshape(Bt, S, D)               # stays resident until b++


# ----------------------------------------------------------------------------
# Wrapper
# ----------------------------------------------------------------------------
def _choose_batch_tile(B, S, D, budget_bytes=4 << 20):
    """Largest divisor of B whose (Bt,S,D) f32 block fits the budget; stop
    growing once M = Bt*S is comfortably MXU-filling."""
    best = 1
    for bt in range(1, B + 1):
        if B % bt == 0 and bt * S * D * 4 <= budget_bytes:
            best = bt
            if bt * S >= 512:
                break
    return best


def encoder_forward(X, X_lens, pos_table, layer_params, num_heads):
    del X_lens  # TODO(synk): key-padding mask from X_lens not applied (mask=None path)
    B, S, D = X.shape
    H = num_heads
    dh = D // H
    L = len(layer_params)
    dff = layer_params[0]["w1"].shape[1]
    Dmax = max(D, dff)

    sp = stack_params(layer_params, num_heads)
    pos = pos_table[:S]

    Bt = _choose_batch_tile(B, S, D)
    act_spec = pl.BlockSpec((Bt, S, D), lambda b, l: (b, 0, 0))

    def lspec(*tail):
        n = len(tail)
        return pl.BlockSpec((1,) + tuple(tail),
                            lambda b, l, n=n: (l,) + (0,) * n)

    in_specs = [
        act_spec,                                    # X (fetched once per b)
        pl.BlockSpec((S, D), lambda b, l: (0, 0)),   # pos table (fetched once)
        lspec(D, 3 * D),                             # fused wqkv
        lspec(1, 3 * D),                             # fused bqkv (scale folded)
        lspec(H, dh, D),                             # wo, pre-split per head
        lspec(D, dff),                               # ffn w1
        lspec(dff, D),                               # ffn w2
        lspec(8, Dmax),                              # packed bo,g1,be1,b1,b2,g2,be2
    ]

    # VMEM budget: double-buffered layer weights + activation blocks + temps.
    wbytes = (D * 3 * D + D * D + D * dff + dff * D + 8 * Dmax) * 4
    abytes = (2 * Bt * S * D + S * D) * 4
    tbytes = Bt * S * (3 * D + dff + 6 * D) * 4
    vmem_limit = int(min(100 << 20,
                         max(32 << 20, 2 * (wbytes + abytes) + tbytes + (8 << 20))))

    kernel = functools.partial(encoder_stack_kernel,
                               num_heads=H, d_head=dh, d_ff=dff)

    return pl.pallas_call(
        kernel,
        out_shape=jax.ShapeDtypeStruct((B, S, D), jnp.float32),
        grid_spec=pltpu.PrefetchScalarGridSpec(
            num_scalar_prefetch=0,
            grid=(B // Bt, L),                 # layer axis last -> runs in order
            in_specs=in_specs,
            out_specs=act_spec),
        compiler_params=pltpu.CompilerParams(
            dimension_semantics=("parallel", "arbitrary"),
            vmem_limit_bytes=vmem_limit),
    )(X, pos, sp["wqkv"], sp["bqkv"], sp["wo"], sp["w1"], sp["w2"], sp["vecs"])


# ----------------------------------------------------------------------------
if __name__ == "__main__":
    key = jax.random.PRNGKey(0)
    B, S = 2, 8
    enc_dim, num_heads, dff = 32, 4, 64
    num_layers, tgt_len = 2, 16

    k_x, k_p = jax.random.split(key)
    x = jax.random.normal(k_x, (B, S, enc_dim), dtype=jnp.float32)
    x_lens = jnp.full((B,), S, dtype=jnp.int32)

    params = init_params(k_p, num_layers, enc_dim, num_heads, dff)
    pos_table = pos_sinusoid_embedding(tgt_len, enc_dim)

    out = encoder_forward(x, x_lens, pos_table, params, num_heads)
    jax.block_until_ready(out)
    assert out.shape == (B, S, enc_dim)
    assert bool(jnp.all(jnp.isfinite(out)))
    print("KERNEL_OK")
</pallas_src>

<mosaic_0001>
module attributes {stable_mosaic.version = 11 : i64} {
  func.func @encoder_stack_kernel(%arg0: i32, %arg1: i32, %arg2: memref<2x8x32xf32, #tpu.memory_space<vmem>>, %arg3: memref<8x32xf32, #tpu.memory_space<vmem>>, %arg4: memref<1x32x96xf32, #tpu.memory_space<vmem>>, %arg5: memref<1x1x96xf32, #tpu.memory_space<vmem>>, %arg6: memref<1x4x8x32xf32, #tpu.memory_space<vmem>>, %arg7: memref<1x32x64xf32, #tpu.memory_space<vmem>>, %arg8: memref<1x64x32xf32, #tpu.memory_space<vmem>>, %arg9: memref<1x8x64xf32, #tpu.memory_space<vmem>>, %arg10: memref<2x8x32xf32, #tpu.memory_space<vmem>>) attributes {dimension_semantics = [#tpu.dimension_semantics<parallel>, #tpu.dimension_semantics<arbitrary>], iteration_bounds = array<i64: 1, 2>, scalar_prefetch = 0 : i64, scratch_operands = 0 : i64, tpu.core_type = #tpu.core_type<tc>, window_params = [{transform_indices = @transform_0, window_bounds = array<i64: 2, 8, 32>}, {pipeline_mode = #tpu.pipeline_mode<synchronous>, transform_indices = @transform_1, window_bounds = array<i64: 8, 32>}, {transform_indices = @transform_2, window_bounds = array<i64: 1, 32, 96>}, {transform_indices = @transform_3, window_bounds = array<i64: 1, 1, 96>}, {transform_indices = @transform_4, window_bounds = array<i64: 1, 4, 8, 32>}, {transform_indices = @transform_5, window_bounds = array<i64: 1, 32, 64>}, {transform_indices = @transform_6, window_bounds = array<i64: 1, 64, 32>}, {transform_indices = @transform_7, window_bounds = array<i64: 1, 8, 64>}, {transform_indices = @transform_8, window_bounds = array<i64: 2, 8, 32>}]} {
    %c0_i32 = arith.constant 0 : i32
    %0 = arith.cmpi eq, %arg1, %c0_i32 : i32
    %1 = arith.extui %0 : i1 to i32
    %c0_i32_0 = arith.constant 0 : i32
    %2 = arith.cmpi ne, %1, %c0_i32_0 : i32
    scf.if %2 {
      %c0_67 = arith.constant 0 : index
      %c0_68 = arith.constant 0 : index
      %c0_69 = arith.constant 0 : index
      %174 = vector.load %arg2[%c0_67, %c0_68, %c0_69] : memref<2x8x32xf32, #tpu.memory_space<vmem>>, vector<2x8x32xf32>
      %c0_70 = arith.constant 0 : index
      %c0_71 = arith.constant 0 : index
      %175 = vector.load %arg3[%c0_70, %c0_71] : memref<8x32xf32, #tpu.memory_space<vmem>>, vector<8x32xf32>
      %176 = vector.shape_cast %175 : vector<8x32xf32> to vector<1x8x32xf32>
      %177 = vector.broadcast %176 : vector<1x8x32xf32> to vector<2x8x32xf32>
      %178 = arith.addf %174, %177 : vector<2x8x32xf32>
      %c0_72 = arith.constant 0 : index
      %c0_73 = arith.constant 0 : index
      %c0_74 = arith.constant 0 : index
      %179 = vector.load %arg10[%c0_72, %c0_73, %c0_74] : memref<2x8x32xf32, #tpu.memory_space<vmem>>, vector<2x8x32xf32>
      tpu.vector_store %arg10[%c0_72, %c0_73, %c0_74], %178 {strides = array<i32>} : memref<2x8x32xf32, #tpu.memory_space<vmem>>, vector<2x8x32xf32>,
    } else {
    }
    %c0 = arith.constant 0 : index
    %c0_1 = arith.constant 0 : index
    %c0_2 = arith.constant 0 : index
    %3 = vector.load %arg10[%c0, %c0_1, %c0_2] : memref<2x8x32xf32, #tpu.memory_space<vmem>>, vector<2x8x32xf32>
    %4 = vector.shape_cast %3 : vector<2x8x32xf32> to vector<16x32xf32>
    %c0_3 = arith.constant 0 : index
    %c0_4 = arith.constant 0 : index
    %c0_5 = arith.constant 0 : index
    %5 = vector.load %arg9[%c0_3, %c0_4, %c0_5] : memref<1x8x64xf32, #tpu.memory_space<vmem>>, vector<1x8x64xf32>
    %6 = vector.shape_cast %5 : vector<1x8x64xf32> to vector<8x64xf32>
    %7 = vector.extract_strided_slice %6 {offsets = [0, 0], sizes = [1, 32], strides = [1, 1]} : vector<8x64xf32> to vector<1x32xf32>
    %8 = vector.extract_strided_slice %6 {offsets = [1, 0], sizes = [1, 32], strides = [1, 1]} : vector<8x64xf32> to vector<1x32xf32>
    %9 = vector.extract_strided_slice %6 {offsets = [2, 0], sizes = [1, 32], strides = [1, 1]} : vector<8x64xf32> to vector<1x32xf32>
    %10 = vector.extract_strided_slice %6 {offsets = [3, 0], sizes = [1, 64], strides = [1, 1]} : vector<8x64xf32> to vector<1x64xf32>
    %11 = vector.extract_strided_slice %6 {offsets = [4, 0], sizes = [1, 32], strides = [1, 1]} : vector<8x64xf32> to vector<1x32xf32>
    %12 = vector.extract_strided_slice %6 {offsets = [5, 0], sizes = [1, 32], strides = [1, 1]} : vector<8x64xf32> to vector<1x32xf32>
    %13 = vector.extract_strided_slice %6 {offsets = [6, 0], sizes = [1, 32], strides = [1, 1]} : vector<8x64xf32> to vector<1x32xf32>
    %c0_6 = arith.constant 0 : index
    %c0_7 = arith.constant 0 : index
    %c0_8 = arith.constant 0 : index
    %14 = vector.load %arg4[%c0_6, %c0_7, %c0_8] : memref<1x32x96xf32, #tpu.memory_space<vmem>>, vector<1x32x96xf32>
    %15 = vector.shape_cast %14 : vector<1x32x96xf32> to vector<32x96xf32>
    %cst = arith.constant dense<0.000000e+00> : vector<16x96xf32>
    %16 = tpu.matmul %4, %15, %cst {dimension_numbers = #tpu.dot_dimension_numbers<[1], [0], [0], [1], [0, 0, 1, 1], [], []>} : vector<16x32xf32>, vector<32x96xf32>, vector<16x96xf32> -> vector<16x96xf32>
    %c0_9 = arith.constant 0 : index
    %c0_10 = arith.constant 0 : index
    %c0_11 = arith.constant 0 : index
    %17 = vector.load %arg5[%c0_9, %c0_10, %c0_11] : memref<1x1x96xf32, #tpu.memory_space<vmem>>, vector<1x1x96xf32>
    %18 = vector.shape_cast %17 : vector<1x1x96xf32> to vector<1x96xf32>
    %19 = vector.broadcast %18 : vector<1x96xf32> to vector<16x96xf32>
    %20 = arith.addf %16, %19 : vector<16x96xf32>
    %21 = vector.extract_strided_slice %20 {offsets = [0, 0], sizes = [16, 8], strides = [1, 1]} : vector<16x96xf32> to vector<16x8xf32>
    %22 = vector.shape_cast %21 : vector<16x8xf32> to vector<2x8x8xf32>
    %23 = vector.extract_strided_slice %20 {offsets = [0, 32], sizes = [16, 8], strides = [1, 1]} : vector<16x96xf32> to vector<16x8xf32>
    %24 = vector.shape_cast %23 : vector<16x8xf32> to vector<2x8x8xf32>
    %25 = vector.extract_strided_slice %20 {offsets = [0, 64], sizes = [16, 8], strides = [1, 1]} : vector<16x96xf32> to vector<16x8xf32>
    %26 = vector.shape_cast %25 : vector<16x8xf32> to vector<2x8x8xf32>
    "tpu.trace_start"() <{level = 10 : i32, message = "bqe,bke->bqk"}> : () -> ()
    %cst_12 = arith.constant dense<0.000000e+00> : vector<2x8x8xf32>
    %27 = tpu.matmul %22, %24, %cst_12 {dimension_numbers = #tpu.dot_dimension_numbers<[2], [2], [1], [1], [0, 0, 0, 1, 1, 1], [0], [0]>} : vector<2x8x8xf32>, vector<2x8x8xf32>, vector<2x8x8xf32> -> vector<2x8x8xf32>
    "tpu.trace_stop"() : () -> ()
    %cst_13 = arith.constant dense<0xFF800000> : vector<2x8xf32>
    %28 = vector.multi_reduction <maximumf>, %27, %cst_13 [2] : vector<2x8x8xf32> to vector<2x8xf32>
    %29 = vector.shape_cast %28 : vector<2x8xf32> to vector<2x8x1xf32>
    %30 = vector.broadcast %29 : vector<2x8x1xf32> to vector<2x8x8xf32>
    %31 = arith.subf %27, %30 : vector<2x8x8xf32>
    %32 = math.exp %31 : vector<2x8x8xf32>
    %cst_14 = arith.constant dense<0.000000e+00> : vector<2x8xf32>
    %33 = vector.multi_reduction <add>, %32, %cst_14 [2] : vector<2x8x8xf32> to vector<2x8xf32>
    %34 = vector.shape_cast %33 : vector<2x8xf32> to vector<2x8x1xf32>
    %35 = tpu.reciprocal %34 {approx = true} : vector<2x8x1xf32> -> vector<2x8x1xf32>
    %36 = vector.broadcast %35 : vector<2x8x1xf32> to vector<2x8x8xf32>
    %37 = arith.mulf %32, %36 : vector<2x8x8xf32>
    "tpu.trace_start"() <{level = 10 : i32, message = "bqk,bke->bqe"}> : () -> ()
    %cst_15 = arith.constant dense<0.000000e+00> : vector<2x8x8xf32>
    %38 = tpu.matmul %37, %26, %cst_15 {dimension_numbers = #tpu.dot_dimension_numbers<[2], [1], [1], [2], [0, 0, 0, 1, 1, 2], [0], [0]>} : vector<2x8x8xf32>, vector<2x8x8xf32>, vector<2x8x8xf32> -> vector<2x8x8xf32>
    "tpu.trace_stop"() : () -> ()
    %39 = vector.shape_cast %38 : vector<2x8x8xf32> to vector<16x8xf32>
    %c0_16 = arith.constant 0 : index
    %c0_17 = arith.constant 0 : index
    %c0_18 = arith.constant 0 : index
    %c0_19 = arith.constant 0 : index
    %40 = vector.load %arg6[%c0_16, %c0_17, %c0_18, %c0_19] : memref<1x4x8x32xf32, #tpu.memory_space<vmem>>, vector<1x1x8x32xf32>
    %41 = vector.shape_cast %40 : vector<1x1x8x32xf32> to vector<8x32xf32>
    %cst_20 = arith.constant dense<0.000000e+00> : vector<16x32xf32>
    %42 = tpu.matmul %39, %41, %cst_20 {dimension_numbers = #tpu.dot_dimension_numbers<[1], [0], [0], [1], [0, 0, 1, 1], [], []>} : vector<16x8xf32>, vector<8x32xf32>, vector<16x32xf32> -> vector<16x32xf32>
    %43 = vector.extract_strided_slice %20 {offsets = [0, 8], sizes = [16, 8], strides = [1, 1]} : vector<16x96xf32> to vector<16x8xf32>
    %44 = vector.shape_cast %43 : vector<16x8xf32> to vector<2x8x8xf32>
    %45 = vector.extract_strided_slice %20 {offsets = [0, 40], sizes = [16, 8], strides = [1, 1]} : vector<16x96xf32> to vector<16x8xf32>
    %46 = vector.shape_cast %45 : vector<16x8xf32> to vector<2x8x8xf32>
    %47 = vector.extract_strided_slice %20 {offsets = [0, 72], sizes = [16, 8], strides = [1, 1]} : vector<16x96xf32> to vector<16x8xf32>
    %48 = vector.shape_cast %47 : vector<16x8xf32> to vector<2x8x8xf32>
    "tpu.trace_start"() <{level = 10 : i32, message = "bqe,bke->bqk"}> : () -> ()
    %cst_21 = arith.constant dense<0.000000e+00> : vector<2x8x8xf32>
    %49 = tpu.matmul %44, %46, %cst_21 {dimension_numbers = #tpu.dot_dimension_numbers<[2], [2], [1], [1], [0, 0, 0, 1, 1, 1], [0], [0]>} : vector<2x8x8xf32>, vector<2x8x8xf32>, vector<2x8x8xf32> -> vector<2x8x8xf32>
    "tpu.trace_stop"() : () -> ()
    %cst_22 = arith.constant dense<0xFF800000> : vector<2x8xf32>
    %50 = vector.multi_reduction <maximumf>, %49, %cst_22 [2] : vector<2x8x8xf32> to vector<2x8xf32>
    %51 = vector.shape_cast %50 : vector<2x8xf32> to vector<2x8x1xf32>
    %52 = vector.broadcast %51 : vector<2x8x1xf32> to vector<2x8x8xf32>
    %53 = arith.subf %49, %52 : vector<2x8x8xf32>
    %54 = math.exp %53 : vector<2x8x8xf32>
    %cst_23 = arith.constant dense<0.000000e+00> : vector<2x8xf32>
    %55 = vector.multi_reduction <add>, %54, %cst_23 [2] : vector<2x8x8xf32> to vector<2x8xf32>
    %56 = vector.shape_cast %55 : vector<2x8xf32> to vector<2x8x1xf32>
    %57 = tpu.reciprocal %56 {approx = true} : vector<2x8x1xf32> -> vector<2x8x1xf32>
    %58 = vector.broadcast %57 : vector<2x8x1xf32> to vector<2x8x8xf32>
    %59 = arith.mulf %54, %58 : vector<2x8x8xf32>
    "tpu.trace_start"() <{level = 10 : i32, message = "bqk,bke->bqe"}> : () -> ()
    %cst_24 = arith.constant dense<0.000000e+00> : vector<2x8x8xf32>
    %60 = tpu.matmul %59, %48, %cst_24 {dimension_numbers = #tpu.dot_dimension_numbers<[2], [1], [1], [2], [0, 0, 0, 1, 1, 2], [0], [0]>} : vector<2x8x8xf32>, vector<2x8x8xf32>, vector<2x8x8xf32> -> vector<2x8x8xf32>
    "tpu.trace_stop"() : () -> ()
    %61 = vector.shape_cast %60 : vector<2x8x8xf32> to vector<16x8xf32>
    %c0_25 = arith.constant 0 : index
    %c1 = arith.constant 1 : index
    %c0_26 = arith.constant 0 : index
    %c0_27 = arith.constant 0 : index
    %62 = vector.load %arg6[%c0_25, %c1, %c0_26, %c0_27] : memref<1x4x8x32xf32, #tpu.memory_space<vmem>>, vector<1x1x8x32xf32>
    %63 = vector.shape_cast %62 : vector<1x1x8x32xf32> to vector<8x32xf32>
    %cst_28 = arith.constant dense<0.000000e+00> : vector<16x32xf32>
    %64 = tpu.matmul %61, %63, %cst_28 {dimension_numbers = #tpu.dot_dimension_numbers<[1], [0], [0], [1], [0, 0, 1, 1], [], []>} : vector<16x8xf32>, vector<8x32xf32>, vector<16x32xf32> -> vector<16x32xf32>
    %65 = arith.addf %42, %64 : vector<16x32xf32>
    %66 = vector.extract_strided_slice %20 {offsets = [0, 16], sizes = [16, 8], strides = [1, 1]} : vector<16x96xf32> to vector<16x8xf32>
    %67 = vector.shape_cast %66 : vector<16x8xf32> to vector<2x8x8xf32>
    %68 = vector.extract_strided_slice %20 {offsets = [0, 48], sizes = [16, 8], strides = [1, 1]} : vector<16x96xf32> to vector<16x8xf32>
    %69 = vector.shape_cast %68 : vector<16x8xf32> to vector<2x8x8xf32>
    %70 = vector.extract_strided_slice %20 {offsets = [0, 80], sizes = [16, 8], strides = [1, 1]} : vector<16x96xf32> to vector<16x8xf32>
    %71 = vector.shape_cast %70 : vector<16x8xf32> to vector<2x8x8xf32>
    "tpu.trace_start"() <{level = 10 : i32, message = "bqe,bke->bqk"}> : () -> ()
    %cst_29 = arith.constant dense<0.000000e+00> : vector<2x8x8xf32>
    %72 = tpu.matmul %67, %69, %cst_29 {dimension_numbers = #tpu.dot_dimension_numbers<[2], [2], [1], [1], [0, 0, 0, 1, 1, 1], [0], [0]>} : vector<2x8x8xf32>, vector<2x8x8xf32>, vector<2x8x8xf32> -> vector<2x8x8xf32>
    "tpu.trace_stop"() : () -> ()
    %cst_30 = arith.constant dense<0xFF800000> : vector<2x8xf32>
    %73 = vector.multi_reduction <maximumf>, %72, %cst_30 [2] : vector<2x8x8xf32> to vector<2x8xf32>
    %74 = vector.shape_cast %73 : vector<2x8xf32> to vector<2x8x1xf32>
    %75 = vector.broadcast %74 : vector<2x8x1xf32> to vector<2x8x8xf32>
    %76 = arith.subf %72, %75 : vector<2x8x8xf32>
    %77 = math.exp %76 : vector<2x8x8xf32>
    %cst_31 = arith.constant dense<0.000000e+00> : vector<2x8xf32>
    %78 = vector.multi_reduction <add>, %77, %cst_31 [2] : vector<2x8x8xf32> to vector<2x8xf32>
    %79 = vector.shape_cast %78 : vector<2x8xf32> to vector<2x8x1xf32>
    %80 = tpu.reciprocal %79 {approx = true} : vector<2x8x1xf32> -> vector<2x8x1xf32>
    %81 = vector.broadcast %80 : vector<2x8x1xf32> to vector<2x8x8xf32>
    %82 = arith.mulf %77, %81 : vector<2x8x8xf32>
    "tpu.trace_start"() <{level = 10 : i32, message = "bqk,bke->bqe"}> : () -> ()
    %cst_32 = arith.constant dense<0.000000e+00> : vector<2x8x8xf32>
    %83 = tpu.matmul %82, %71, %cst_32 {dimension_numbers = #tpu.dot_dimension_numbers<[2], [1], [1], [2], [0, 0, 0, 1, 1, 2], [0], [0]>} : vector<2x8x8xf32>, vector<2x8x8xf32>, vector<2x8x8xf32> -> vector<2x8x8xf32>
    "tpu.trace_stop"() : () -> ()
    %84 = vector.shape_cast %83 : vector<2x8x8xf32> to vector<16x8xf32>
    %c0_33 = arith.constant 0 : index
    %c2 = arith.constant 2 : index
    %c0_34 = arith.constant 0 : index
    %c0_35 = arith.constant 0 : index
    %85 = vector.load %arg6[%c0_33, %c2, %c0_34, %c0_35] : memref<1x4x8x32xf32, #tpu.memory_space<vmem>>, vector<1x1x8x32xf32>
    %86 = vector.shape_cast %85 : vector<1x1x8x32xf32> to vector<8x32xf32>
    %cst_36 = arith.constant dense<0.000000e+00> : vector<16x32xf32>
    %87 = tpu.matmul %84, %86, %cst_36 {dimension_numbers = #tpu.dot_dimension_numbers<[1], [0], [0], [1], [0, 0, 1, 1], [], []>} : vector<16x8xf32>, vector<8x32xf32>, vector<16x32xf32> -> vector<16x32xf32>
    %88 = arith.addf %65, %87 : vector<16x32xf32>
    %89 = vector.extract_strided_slice %20 {offsets = [0, 24], sizes = [16, 8], strides = [1, 1]} : vector<16x96xf32> to vector<16x8xf32>
    %90 = vector.shape_cast %89 : vector<16x8xf32> to vector<2x8x8xf32>
    %91 = vector.extract_strided_slice %20 {offsets = [0, 56], sizes = [16, 8], strides = [1, 1]} : vector<16x96xf32> to vector<16x8xf32>
    %92 = vector.shape_cast %91 : vector<16x8xf32> to vector<2x8x8xf32>
    %93 = vector.extract_strided_slice %20 {offsets = [0, 88], sizes = [16, 8], strides = [1, 1]} : vector<16x96xf32> to vector<16x8xf32>
    %94 = vector.shape_cast %93 : vector<16x8xf32> to vector<2x8x8xf32>
    "tpu.trace_start"() <{level = 10 : i32, message = "bqe,bke->bqk"}> : () -> ()
    %cst_37 = arith.constant dense<0.000000e+00> : vector<2x8x8xf32>
    %95 = tpu.matmul %90, %92, %cst_37 {dimension_numbers = #tpu.dot_dimension_numbers<[2], [2], [1], [1], [0, 0, 0, 1, 1, 1], [0], [0]>} : vector<2x8x8xf32>, vector<2x8x8xf32>, vector<2x8x8xf32> -> vector<2x8x8xf32>
    "tpu.trace_stop"() : () -> ()
    %cst_38 = arith.constant dense<0xFF800000> : vector<2x8xf32>
    %96 = vector.multi_reduction <maximumf>, %95, %cst_38 [2] : vector<2x8x8xf32> to vector<2x8xf32>
    %97 = vector.shape_cast %96 : vector<2x8xf32> to vector<2x8x1xf32>
    %98 = vector.broadcast %97 : vector<2x8x1xf32> to vector<2x8x8xf32>
    %99 = arith.subf %95, %98 : vector<2x8x8xf32>
    %100 = math.exp %99 : vector<2x8x8xf32>
    %cst_39 = arith.constant dense<0.000000e+00> : vector<2x8xf32>
    %101 = vector.multi_reduction <add>, %100, %cst_39 [2] : vector<2x8x8xf32> to vector<2x8xf32>
    %102 = vector.shape_cast %101 : vector<2x8xf32> to vector<2x8x1xf32>
    %103 = tpu.reciprocal %102 {approx = true} : vector<2x8x1xf32> -> vector<2x8x1xf32>
    %104 = vector.broadcast %103 : vector<2x8x1xf32> to vector<2x8x8xf32>
    %105 = arith.mulf %100, %104 : vector<2x8x8xf32>
    "tpu.trace_start"() <{level = 10 : i32, message = "bqk,bke->bqe"}> : () -> ()
    %cst_40 = arith.constant dense<0.000000e+00> : vector<2x8x8xf32>
    %106 = tpu.matmul %105, %94, %cst_40 {dimension_numbers = #tpu.dot_dimension_numbers<[2], [1], [1], [2], [0, 0, 0, 1, 1, 2], [0], [0]>} : vector<2x8x8xf32>, vector<2x8x8xf32>, vector<2x8x8xf32> -> vector<2x8x8xf32>
    "tpu.trace_stop"() : () -> ()
    %107 = vector.shape_cast %106 : vector<2x8x8xf32> to vector<16x8xf32>
    %c0_41 = arith.constant 0 : index
    %c3 = arith.constant 3 : index
    %c0_42 = arith.constant 0 : index
    %c0_43 = arith.constant 0 : index
    %108 = vector.load %arg6[%c0_41, %c3, %c0_42, %c0_43] : memref<1x4x8x32xf32, #tpu.memory_space<vmem>>, vector<1x1x8x32xf32>
    %109 = vector.shape_cast %108 : vector<1x1x8x32xf32> to vector<8x32xf32>
    %cst_44 = arith.constant dense<0.000000e+00> : vector<16x32xf32>
    %110 = tpu.matmul %107, %109, %cst_44 {dimension_numbers = #tpu.dot_dimension_numbers<[1], [0], [0], [1], [0, 0, 1, 1], [], []>} : vector<16x8xf32>, vector<8x32xf32>, vector<16x32xf32> -> vector<16x32xf32>
    %111 = arith.addf %88, %110 : vector<16x32xf32>
    %112 = vector.broadcast %7 : vector<1x32xf32> to vector<16x32xf32>
    %113 = arith.addf %111, %112 : vector<16x32xf32>
    %114 = arith.addf %4, %113 : vector<16x32xf32>
    %cst_45 = arith.constant dense<0.000000e+00> : vector<16xf32>
    %115 = vector.multi_reduction <add>, %114, %cst_45 [1] : vector<16x32xf32> to vector<16xf32>
    %116 = vector.shape_cast %115 : vector<16xf32> to vector<16x1xf32>
    %cst_46 = arith.constant 3.200000e+01 : f32
    %117 = vector.broadcast %cst_46 : f32 to vector<16x1xf32>
    %118 = arith.divf %116, %117 : vector<16x1xf32>
    %119 = arith.mulf %114, %114 : vector<16x32xf32>
    %cst_47 = arith.constant dense<0.000000e+00> : vector<16xf32>
    %120 = vector.multi_reduction <add>, %119, %cst_47 [1] : vector<16x32xf32> to vector<16xf32>
    %121 = vector.shape_cast %120 : vector<16xf32> to vector<16x1xf32>
    %cst_48 = arith.constant 3.200000e+01 : f32
    %122 = vector.broadcast %cst_48 : f32 to vector<16x1xf32>
    %123 = arith.divf %121, %122 : vector<16x1xf32>
    %124 = arith.mulf %118, %118 : vector<16x1xf32>
    %125 = arith.subf %123, %124 : vector<16x1xf32>
    %126 = vector.broadcast %118 : vector<16x1xf32> to vector<16x32xf32>
    %127 = arith.subf %114, %126 : vector<16x32xf32>
    %cst_49 = arith.constant 9.99999974E-6 : f32
    %128 = vector.broadcast %cst_49 : f32 to vector<16x1xf32>
    %129 = arith.addf %125, %128 : vector<16x1xf32>
    %130 = math.rsqrt %129 : vector<16x1xf32>
    %131 = vector.broadcast %130 : vector<16x1xf32> to vector<16x32xf32>
    %132 = arith.mulf %127, %131 : vector<16x32xf32>
    %133 = vector.broadcast %8 : vector<1x32xf32> to vector<16x32xf32>
    %134 = arith.mulf %132, %133 : vector<16x32xf32>
    %135 = vector.broadcast %9 : vector<1x32xf32> to vector<16x32xf32>
    %136 = arith.addf %134, %135 : vector<16x32xf32>
    %c0_50 = arith.constant 0 : index
    %c0_51 = arith.constant 0 : index
    %c0_52 = arith.constant 0 : index
    %137 = vector.load %arg7[%c0_50, %c0_51, %c0_52] : memref<1x32x64xf32, #tpu.memory_space<vmem>>, vector<1x32x64xf32>
    %138 = vector.shape_cast %137 : vector<1x32x64xf32> to vector<32x64xf32>
    %cst_53 = arith.constant dense<0.000000e+00> : vector<16x64xf32>
    %139 = tpu.matmul %136, %138, %cst_53 {dimension_numbers = #tpu.dot_dimension_numbers<[1], [0], [0], [1], [0, 0, 1, 1], [], []>} : vector<16x32xf32>, vector<32x64xf32>, vector<16x64xf32> -> vector<16x64xf32>
    %140 = vector.broadcast %10 : vector<1x64xf32> to vector<16x64xf32>
    %141 = arith.addf %139, %140 : vector<16x64xf32>
    %cst_54 = arith.constant 0.000000e+00 : f32
    %142 = vector.broadcast %cst_54 : f32 to vector<16x64xf32>
    %143 = arith.maximumf %141, %142 : vector<16x64xf32>
    %c0_55 = arith.constant 0 : index
    %c0_56 = arith.constant 0 : index
    %c0_57 = arith.constant 0 : index
    %144 = vector.load %arg8[%c0_55, %c0_56, %c0_57] : memref<1x64x32xf32, #tpu.memory_space<vmem>>, vector<1x64x32xf32>
    %145 = vector.shape_cast %144 : vector<1x64x32xf32> to vector<64x32xf32>
    %cst_58 = arith.constant dense<0.000000e+00> : vector<16x32xf32>
    %146 = tpu.matmul %143, %145, %cst_58 {dimension_numbers = #tpu.dot_dimension_numbers<[1], [0], [0], [1], [0, 0, 1, 1], [], []>} : vector<16x64xf32>, vector<64x32xf32>, vector<16x32xf32> -> vector<16x32xf32>
    %147 = vector.broadcast %11 : vector<1x32xf32> to vector<16x32xf32>
    %148 = arith.addf %146, %147 : vector<16x32xf32>
    %149 = arith.addf %136, %148 : vector<16x32xf32>
    %cst_59 = arith.constant dense<0.000000e+00> : vector<16xf32>
    %150 = vector.multi_reduction <add>, %149, %cst_59 [1] : vector<16x32xf32> to vector<16xf32>
    %151 = vector.shape_cast %150 : vector<16xf32> to vector<16x1xf32>
    %cst_60 = arith.constant 3.200000e+01 : f32
    %152 = vector.broadcast %cst_60 : f32 to vector<16x1xf32>
    %153 = arith.divf %151, %152 : vector<16x1xf32>
    %154 = arith.mulf %149, %149 : vector<16x32xf32>
    %cst_61 = arith.constant dense<0.000000e+00> : vector<16xf32>
    %155 = vector.multi_reduction <add>, %154, %cst_61 [1] : vector<16x32xf32> to vector<16xf32>
    %156 = vector.shape_cast %155 : vector<16xf32> to vector<16x1xf32>
    %cst_62 = arith.constant 3.200000e+01 : f32
    %157 = vector.broadcast %cst_62 : f32 to vector<16x1xf32>
    %158 = arith.divf %156, %157 : vector<16x1xf32>
    %159 = arith.mulf %153, %153 : vector<16x1xf32>
    %160 = arith.subf %158, %159 : vector<16x1xf32>
    %161 = vector.broadcast %153 : vector<16x1xf32> to vector<16x32xf32>
    %162 = arith.subf %149, %161 : vector<16x32xf32>
    %cst_63 = arith.constant 9.99999974E-6 : f32
    %163 = vector.broadcast %cst_63 : f32 to vector<16x1xf32>
    %164 = arith.addf %160, %163 : vector<16x1xf32>
    %165 = math.rsqrt %164 : vector<16x1xf32>
    %166 = vector.broadcast %165 : vector<16x1xf32> to vector<16x32xf32>
    %167 = arith.mulf %162, %166 : vector<16x32xf32>
    %168 = vector.broadcast %12 : vector<1x32xf32> to vector<16x32xf32>
    %169 = arith.mulf %167, %168 : vector<16x32xf32>
    %170 = vector.broadcast %13 : vector<1x32xf32> to vector<16x32xf32>
    %171 = arith.addf %169, %170 : vector<16x32xf32>
    %172 = vector.shape_cast %171 : vector<16x32xf32> to vector<2x8x32xf32>
    %c0_64 = arith.constant 0 : index
    %c0_65 = arith.constant 0 : index
    %c0_66 = arith.constant 0 : index
    %173 = vector.load %arg10[%c0_64, %c0_65, %c0_66] : memref<2x8x32xf32, #tpu.memory_space<vmem>>, vector<2x8x32xf32>
    tpu.vector_store %arg10[%c0_64, %c0_65, %c0_66], %172 {strides = array<i32>} : memref<2x8x32xf32, #tpu.memory_space<vmem>>, vector<2x8x32xf32>,
    return
  }
  func.func @transform_0(%arg0: i32, %arg1: i32) -> (i32, i32, i32) {
    %c0_i32 = arith.constant 0 : i32
    %c0_i32_0 = arith.constant 0 : i32
    %c0_i32_1 = arith.constant 0 : i32
    return %arg0, %c0_i32, %c0_i32_0 : i32, i32, i32
  }
  func.func @transform_1(%arg0: i32, %arg1: i32) -> (i32, i32) {
    %c0_i32 = arith.constant 0 : i32
    %c0_i32_0 = arith.constant 0 : i32
    %c0_i32_1 = arith.constant 0 : i32
    return %c0_i32, %c0_i32_0 : i32, i32
  }
  func.func @transform_2(%arg0: i32, %arg1: i32) -> (i32, i32, i32) {
    %c0_i32 = arith.constant 0 : i32
    %c0_i32_0 = arith.constant 0 : i32
    %c0_i32_1 = arith.constant 0 : i32
    return %arg1, %c0_i32, %c0_i32_0 : i32, i32, i32
  }
  func.func @transform_3(%arg0: i32, %arg1: i32) -> (i32, i32, i32) {
    %c0_i32 = arith.constant 0 : i32
    %c0_i32_0 = arith.constant 0 : i32
    %c0_i32_1 = arith.constant 0 : i32
    return %arg1, %c0_i32, %c0_i32_0 : i32, i32, i32
  }
  func.func @transform_4(%arg0: i32, %arg1: i32) -> (i32, i32, i32, i32) {
    %c0_i32 = arith.constant 0 : i32
    %c0_i32_0 = arith.constant 0 : i32
    %c0_i32_1 = arith.constant 0 : i32
    %c0_i32_2 = arith.constant 0 : i32
    return %arg1, %c0_i32, %c0_i32_0, %c0_i32_1 : i32, i32, i32, i32
  }
  func.func @transform_5(%arg0: i32, %arg1: i32) -> (i32, i32, i32) {
    %c0_i32 = arith.constant 0 : i32
    %c0_i32_0 = arith.constant 0 : i32
    %c0_i32_1 = arith.constant 0 : i32
    return %arg1, %c0_i32, %c0_i32_0 : i32, i32, i32
  }
  func.func @transform_6(%arg0: i32, %arg1: i32) -> (i32, i32, i32) {
    %c0_i32 = arith.constant 0 : i32
    %c0_i32_0 = arith.constant 0 : i32
    %c0_i32_1 = arith.constant 0 : i32
    return %arg1, %c0_i32, %c0_i32_0 : i32, i32, i32
  }
  func.func @transform_7(%arg0: i32, %arg1: i32) -> (i32, i32, i32) {
    %c0_i32 = arith.constant 0 : i32
    %c0_i32_0 = arith.constant 0 : i32
    %c0_i32_1 = arith.constant 0 : i32
    return %arg1, %c0_i32, %c0_i32_0 : i32, i32, i32
  }
  func.func @transform_8(%arg0: i32, %arg1: i32) -> (i32, i32, i32) {
    %c0_i32 = arith.constant 0 : i32
    %c0_i32_0 = arith.constant 0 : i32
    %c0_i32_1 = arith.constant 0 : i32
    return %arg0, %c0_i32, %c0_i32_0 : i32, i32, i32
  }
}

</mosaic_0001>

<llo_original>
// kernel: tpu_custom_call.1
$region0: #{tpu_custom_call.1}
  #allocation0 [shape = 'u32[]', space=smem, size = 0x4, offset = 0x4, fixed_abs, tag = 'smem constant byte address 0x4 - core index']
  #allocation1 [shape = 'u32[144,128]{1,0:T(1,128)}', space=vmem, size = 0x12000, scoped, tag = 'internal scratch']
  %s0 = inlined_call_operand.hbm [shape: f32[2,8,32], index: 0, kind: input, shape index: {}]
  %s1 = inlined_call_operand.hbm [shape: f32[8,32], index: 1, kind: input, shape index: {}]
  %s2 = inlined_call_operand.vmem [shape: f32[2,32,96], index: 2, kind: input, shape index: {}]
  %s3 = inlined_call_operand.vmem [shape: f32[2,1,96], index: 3, kind: input, shape index: {}]
  %s4 = inlined_call_operand.vmem [shape: f32[2,4,8,32], index: 4, kind: input, shape index: {}]
  %s5 = inlined_call_operand.vmem [shape: f32[2,32,64], index: 5, kind: input, shape index: {}]
  %s6 = inlined_call_operand.vmem [shape: f32[2,64,32], index: 6, kind: input, shape index: {}]
  %s7 = inlined_call_operand.vmem [shape: f32[2,8,64], index: 7, kind: input, shape index: {}]
  %s8 = inlined_call_operand.hbm [shape: f32[2,8,32], index: 8, kind: output, shape index: {}]
  %s9 = sld [smem:[#allocation0]]
  $region77: #{tpu_custom_call.1} parent=0
    _
  %s11 = ssub.s32 1, %s9
  %s12 = scalar_select 0, %s11, %s9
  $region1: #{tpu_custom_call.1} parent=0
    #allocation2 [shape = 'u8[8192]{0}', space=vmem, size = 0x2000, scoped, tag = 'input window, operand 0, single buffered']
    #allocation3 [shape = 's32[2]{0}', space=sflag, size = 0x8, scoped, tag = 'scoped memory for tpu_custom_call.1']
    #allocation4 [shape = 's32[2]{0}', space=sflag, size = 0x8, scoped, tag = 'scoped memory for tpu_custom_call.1']
    #allocation5 [shape = 'u8[4096]{0}', space=vmem, size = 0x1000, scoped, tag = 'input window, operand 1, single buffered']
    #allocation6 [shape = 's32[1]{0}', space=sflag, size = 0x4, scoped, tag = 'scoped memory for tpu_custom_call.1']
    #allocation7 [shape = 'u8[8192]{0}', space=vmem, size = 0x2000, scoped, tag = 'output window, operand 0, single buffered']
    %13 = vsyncpa [#allocation3], 0
    %14 = vsyncpa [#allocation6], 0
    %15 = vsyncpa [#allocation4], 0
    loop: start=0, step=1, limit=4
    $region2: #{tpu_custom_call.1} parent=1 // loop_pre_header
      _
    $region3: #{tpu_custom_call.1} parent=1 // loop_header
      %s17 = sphi 0, %s21
      %p18 = scmp.ge.s32.totalorder %s17, 4
      %s24 = sphi 0, %s36
      %s25 = sphi 0, %s32
      %s26 = sphi 0, %s24
      %s27 = sphi 0, %s25
      %s28 = sphi 0, %s26
      %s29 = sphi 0, %s27
      %s39 = sphi 0, %s41
      %s42 = sphi 0, %s39
      %s43 = sphi 0, %s42
      %s59 = sphi 0, %s43
      %s63 = sphi 0, %s63
      %s65 = sphi 0, %s63
      %s66 = sphi 0, %s65
      %s80 = sphi 0, %s66
      %s86 = sphi 0, %s88
      %s89 = sphi 0, %s86
      %s90 = sphi 0, %s89
      %s106 = sphi 0, %s90
      %s112 = sphi 0, %s114
      %s115 = sphi 0, %s112
      %s116 = sphi 0, %s115
      %s132 = sphi 0, %s116
      %s138 = sphi 0, %s140
      %s141 = sphi 0, %s138
      %s142 = sphi 0, %s141
      %s158 = sphi 0, %s142
      %s164 = sphi 0, %s166
      %s167 = sphi 0, %s164
      %s168 = sphi 0, %s167
      %s184 = sphi 0, %s168
      %s190 = sphi 0, %s192
      %s193 = sphi 0, %s190
      %s194 = sphi 0, %s193
      %s210 = sphi 0, %s194
      %s216 = sphi 0, %s218
      %s219 = sphi 0, %s216
      %s220 = sphi 0, %s219
      %s236 = sphi 0, %s220
      %s242 = sphi 0, %s244
      %s245 = sphi 0, %s242
      %s246 = sphi 0, %s245
      %s262 = sphi 0, %s246
    $region4: #{tpu_custom_call.1} parent=1 // loop_header_branch
      %20 = sbr.rel (%p18) target = $region8
    $region5: #{tpu_custom_call.1} parent=1 // loop_body
      %s22 = ssub.s32 %s17, 1
      %s23 = ssub.s32 %s17, 2
      %s30 = sadd.s32 1, %s25
      %p31 = scmp.ge.s32.totalorder %s30, 2
      %s32 = scalar_select %p31, 0, %s30
      %s33 = sadd.s32 1, %s24
      %s34 = scalar_select %p31, %s33, %s24
      %p35 = scmp.ge.s32.totalorder %s34, 1
      %s36 = scalar_select %p35, 0, %s34
      %s37 = ssub.s32 %s24, %s36
      %p38 = scmp.eq.s32.totalorder %s37, 0
      %s40 = sadd.s32 %s39, 1
      %s41 = scalar_select %p38, %s39, %s40
      %p44 = pneg %p38
      %p45 = scmp.eq.s32.totalorder %s17, 1
      %p46 = por %p44, %p45
      %p47 = scmp.ne.s32.totalorder %s39, %s42
      %p48 = scmp.eq.s32.totalorder %s17, 0
      %p49 = por %p47, %p48
      %p50 = scmp.ne.s32.totalorder %s39, %s42
      %p51 = scmp.eq.s32.totalorder %s22, 1
      %p52 = por %p50, %p51
      %p53 = scmp.ne.s32.totalorder %s42, %s43
      %p54 = scmp.eq.s32.totalorder %s22, 0
      %p55 = por %p53, %p54
      %p56 = scmp.ne.s32.totalorder %s42, %s43
      %p57 = scmp.eq.s32.totalorder %s23, 1
      %p58 = por %p56, %p57
      %p60 = scmp.ne.s32.totalorder %s43, %s59
      %p61 = scmp.eq.s32.totalorder %s23, 0
      %p62 = por %p60, %p61
      %s64 = sadd.s32 %s63, 1
      %p67 = scmp.eq.s32.totalorder %s17, 1
      %p68 = scmp.ne.s32.totalorder %s63, %s65
      %p69 = scmp.eq.s32.totalorder %s17, 0
      %p70 = por %p68, %p69
      %p71 = scmp.ne.s32.totalorder %s63, %s65
      %p72 = scmp.eq.s32.totalorder %s22, 1
      %p73 = por %p71, %p72
      %p74 = scmp.ne.s32.totalorder %s65, %s66
      %p75 = scmp.eq.s32.totalorder %s22, 0
      %p76 = por %p74, %p75
      %p77 = scmp.ne.s32.totalorder %s65, %s66
      %p78 = scmp.eq.s32.totalorder %s23, 1
      %p79 = por %p77, %p78
      %p81 = scmp.ne.s32.totalorder %s66, %s80
      %p82 = scmp.eq.s32.totalorder %s23, 0
      %p83 = por %p81, %p82
      %s84 = ssub.s32 %s25, %s32
      %p85 = scmp.eq.s32.totalorder %s84, 0
      %s87 = sadd.s32 %s86, 1
      %s88 = scalar_select %p85, %s86, %s87
      %p91 = pneg %p85
      %p92 = scmp.eq.s32.totalorder %s17, 1
      %p93 = por %p91, %p92
      %p94 = scmp.ne.s32.totalorder %s86, %s89
      %p95 = scmp.eq.s32.totalorder %s17, 0
      %p96 = por %p94, %p95
      %p97 = scmp.ne.s32.totalorder %s86, %s89
      %p98 = scmp.eq.s32.totalorder %s22, 1
      %p99 = por %p97, %p98
      %p100 = scmp.ne.s32.totalorder %s89, %s90
      %p101 = scmp.eq.s32.totalorder %s22, 0
      %p102 = por %p100, %p101
      %p103 = scmp.ne.s32.totalorder %s89, %s90
      %p104 = scmp.eq.s32.totalorder %s23, 1
      %p105 = por %p103, %p104
      %p107 = scmp.ne.s32.totalorder %s90, %s106
      %p108 = scmp.eq.s32.totalorder %s23, 0
      %p109 = por %p107, %p108
      %s110 = ssub.s32 %s25, %s32
      %p111 = scmp.eq.s32.totalorder %s110, 0
      %s113 = sadd.s32 %s112, 1
      %s114 = scalar_select %p111, %s112, %s113
      %p117 = pneg %p111
      %p118 = scmp.eq.s32.totalorder %s17, 1
      %p119 = por %p117, %p118
      %p120 = scmp.ne.s32.totalorder %s112, %s115
      %p121 = scmp.eq.s32.totalorder %s17, 0
      %p122 = por %p120, %p121
      %p123 = scmp.ne.s32.totalorder %s112, %s115
      %p124 = scmp.eq.s32.totalorder %s22, 1
      %p125 = por %p123, %p124
      %p126 = scmp.ne.s32.totalorder %s115, %s116
      %p127 = scmp.eq.s32.totalorder %s22, 0
      %p128 = por %p126, %p127
      %p129 = scmp.ne.s32.totalorder %s115, %s116
      %p130 = scmp.eq.s32.totalorder %s23, 1
      %p131 = por %p129, %p130
      %p133 = scmp.ne.s32.totalorder %s116, %s132
      %p134 = scmp.eq.s32.totalorder %s23, 0
      %p135 = por %p133, %p134
      %s136 = ssub.s32 %s25, %s32
      %p137 = scmp.eq.s32.totalorder %s136, 0
      %s139 = sadd.s32 %s138, 1
      %s140 = scalar_select %p137, %s138, %s139
      %p143 = pneg %p137
      %p144 = scmp.eq.s32.totalorder %s17, 1
      %p145 = por %p143, %p144
      %p146 = scmp.ne.s32.totalorder %s138, %s141
      %p147 = scmp.eq.s32.totalorder %s17, 0
      %p148 = por %p146, %p147
      %p149 = scmp.ne.s32.totalorder %s138, %s141
      %p150 = scmp.eq.s32.totalorder %s22, 1
      %p151 = por %p149, %p150
      %p152 = scmp.ne.s32.totalorder %s141, %s142
      %p153 = scmp.eq.s32.totalorder %s22, 0
      %p154 = por %p152, %p153
      %p155 = scmp.ne.s32.totalorder %s141, %s142
      %p156 = scmp.eq.s32.totalorder %s23, 1
      %p157 = por %p155, %p156
      %p159 = scmp.ne.s32.totalorder %s142, %s158
      %p160 = scmp.eq.s32.totalorder %s23, 0
      %p161 = por %p159, %p160
      %s162 = ssub.s32 %s25, %s32
      %p163 = scmp.eq.s32.totalorder %s162, 0
      %s165 = sadd.s32 %s164, 1
      %s166 = scalar_select %p163, %s164, %s165
      %p169 = pneg %p163
      %p170 = scmp.eq.s32.totalorder %s17, 1
      %p171 = por %p169, %p170
      %p172 = scmp.ne.s32.totalorder %s164, %s167
      %p173 = scmp.eq.s32.totalorder %s17, 0
      %p174 = por %p172, %p173
      %p175 = scmp.ne.s32.totalorder %s164, %s167
      %p176 = scmp.eq.s32.totalorder %s22, 1
      %p177 = por %p175, %p176
      %p178 = scmp.ne.s32.totalorder %s167, %s168
      %p179 = scmp.eq.s32.totalorder %s22, 0
      %p180 = por %p178, %p179
      %p181 = scmp.ne.s32.totalorder %s167, %s168
      %p182 = scmp.eq.s32.totalorder %s23, 1
      %p183 = por %p181, %p182
      %p185 = scmp.ne.s32.totalorder %s168, %s184
      %p186 = scmp.eq.s32.totalorder %s23, 0
      %p187 = por %p185, %p186
      %s188 = ssub.s32 %s25, %s32
      %p189 = scmp.eq.s32.totalorder %s188, 0
      %s191 = sadd.s32 %s190, 1
      %s192 = scalar_select %p189, %s190, %s191
      %p195 = pneg %p189
      %p196 = scmp.eq.s32.totalorder %s17, 1
      %p197 = por %p195, %p196
      %p198 = scmp.ne.s32.totalorder %s190, %s193
      %p199 = scmp.eq.s32.totalorder %s17, 0
      %p200 = por %p198, %p199
      %p201 = scmp.ne.s32.totalorder %s190, %s193
      %p202 = scmp.eq.s32.totalorder %s22, 1
      %p203 = por %p201, %p202
      %p204 = scmp.ne.s32.totalorder %s193, %s194
      %p205 = scmp.eq.s32.totalorder %s22, 0
      %p206 = por %p204, %p205
      %p207 = scmp.ne.s32.totalorder %s193, %s194
      %p208 = scmp.eq.s32.totalorder %s23, 1
      %p209 = por %p207, %p208
      %p211 = scmp.ne.s32.totalorder %s194, %s210
      %p212 = scmp.eq.s32.totalorder %s23, 0
      %p213 = por %p211, %p212
      %s214 = ssub.s32 %s25, %s32
      %p215 = scmp.eq.s32.totalorder %s214, 0
      %s217 = sadd.s32 %s216, 1
      %s218 = scalar_select %p215, %s216, %s217
      %p221 = pneg %p215
      %p222 = scmp.eq.s32.totalorder %s17, 1
      %p223 = por %p221, %p222
      %p224 = scmp.ne.s32.totalorder %s216, %s219
      %p225 = scmp.eq.s32.totalorder %s17, 0
      %p226 = por %p224, %p225
      %p227 = scmp.ne.s32.totalorder %s216, %s219
      %p228 = scmp.eq.s32.totalorder %s22, 1
      %p229 = por %p227, %p228
      %p230 = scmp.ne.s32.totalorder %s219, %s220
      %p231 = scmp.eq.s32.totalorder %s22, 0
      %p232 = por %p230, %p231
      %p233 = scmp.ne.s32.totalorder %s219, %s220
      %p234 = scmp.eq.s32.totalorder %s23, 1
      %p235 = por %p233, %p234
      %p237 = scmp.ne.s32.totalorder %s220, %s236
      %p238 = scmp.eq.s32.totalorder %s23, 0
      %p239 = por %p237, %p238
      %s240 = ssub.s32 %s24, %s36
      %p241 = scmp.eq.s32.totalorder %s240, 0
      %s243 = sadd.s32 %s242, 1
      %s244 = scalar_select %p241, %s242, %s243
      %p247 = pneg %p241
      %p248 = scmp.eq.s32.totalorder %s17, 1
      %p249 = por %p247, %p248
      %p250 = scmp.ne.s32.totalorder %s242, %s245
      %p251 = scmp.eq.s32.totalorder %s17, 0
      %p252 = por %p250, %p251
      %p253 = scmp.ne.s32.totalorder %s242, %s245
      %p254 = scmp.eq.s32.totalorder %s22, 1
      %p255 = por %p253, %p254
      %p256 = scmp.ne.s32.totalorder %s245, %s246
      %p257 = scmp.eq.s32.totalorder %s22, 0
      %p258 = por %p256, %p257
      %p259 = scmp.ne.s32.totalorder %s245, %s246
      %p260 = scmp.eq.s32.totalorder %s23, 1
      %p261 = por %p259, %p260
      %p263 = scmp.ne.s32.totalorder %s246, %s262
      %p264 = scmp.eq.s32.totalorder %s23, 0
      %p265 = por %p263, %p264
      %p266 = scmp.le.s32.totalorder 1, %s17
      %p267 = scmp.lt.s32.totalorder %s17, 3
      %p268 = pnand %p266, %p267
      %p269 = pneg %p268
      // Predicated region
      $region9: #{tpu_custom_call.1} parent=5 // pred_check
        _
      $region10: #{tpu_custom_call.1} parent=5 // pred_check_branch
        %271 = sbr.rel (%p268) target = $region12
      $region11: #{tpu_custom_call.1} parent=5 // pred_region
        %s272 = ssub.s32 %s17, 1
        // Predicated region
        $region13: #{tpu_custom_call.1} parent=11 // pred_check
          %p273 = pneg %p55
        $region14: #{tpu_custom_call.1} parent=11 // pred_check_branch
          %275 = sbr.rel (%p273) target = $region16
        $region15: #{tpu_custom_call.1} parent=11 // pred_region
          %s276 = smul.u32 2, %s26
          %s278 = ssub.s32 256, 256
          %279 = vsyncadd [#allocation3], %s278
          %s280 = smul.addr %s276, 128
          %s281 = scalar_lea.hbm %s0, %s280
          %s282 = sshll.u32 [#allocation2], 4
          %s283 = int_to_ptr.vmem [resolvable:$true] %s282
          %288 = dma.hbm_to_vmem [thread:$0]  %s281, 256, %s283, [#allocation3], 128, 128, 8
        $region16: #{tpu_custom_call.1} parent=11 // pred_fallthru
          _
        // Predicated region
        $region17: #{tpu_custom_call.1} parent=11 // pred_check
          %p289 = pneg %p76
        $region18: #{tpu_custom_call.1} parent=11 // pred_check_branch
          %291 = sbr.rel (%p289) target = $region20
        $region19: #{tpu_custom_call.1} parent=11 // pred_region
          %s293 = ssub.s32 128, 128
          %294 = vsyncadd [#allocation6], %s293
          %s296 = sshll.u32 [#allocation5], 4
          %s297 = int_to_ptr.vmem [resolvable:$true] %s296
          %299 = dma.hbm_to_vmem [thread:$0]  %s1, 128, %s297, [#allocation6]
        $region20: #{tpu_custom_call.1} parent=11 // pred_fallthru
          _
      $region12: #{tpu_custom_call.1} parent=5 // pred_fallthru
        _
      %p300 = scmp.lt.s32.totalorder %s17, 2
      // Predicated region
      $region21: #{tpu_custom_call.1} parent=5 // pred_check
        %p301 = pneg %p300
      $region22: #{tpu_custom_call.1} parent=5 // pred_check_branch
        %303 = sbr.rel (%p301) target = $region24
      $region23: #{tpu_custom_call.1} parent=5 // pred_region
        // Predicated region
        $region25: #{tpu_custom_call.1} parent=23 // pred_check
          %p304 = pneg %p96
        $region26: #{tpu_custom_call.1} parent=23 // pred_check_branch
          %306 = sbr.rel (%p304) target = $region28
        $region27: #{tpu_custom_call.1} parent=23 // pred_region
          %p307 = scmp.lt.s32.totalorder %s25, 1
          %s308 = scalar_select %p307, %s25, 1
          %s309 = smul.addr %s308, 4
          %s310 = smul.addr %s309, 8
          %s311 = scalar_lea.vmem %s2, %s310
        $region28: #{tpu_custom_call.1} parent=23 // pred_fallthru
          _
        // Predicated region
        $region29: #{tpu_custom_call.1} parent=23 // pred_check
          %p312 = pneg %p122
        $region30: #{tpu_custom_call.1} parent=23 // pred_check_branch
          %314 = sbr.rel (%p312) target = $region32
        $region31: #{tpu_custom_call.1} parent=23 // pred_region
          %p315 = scmp.lt.s32.totalorder %s25, 1
          %s316 = scalar_select %p315, %s25, 1
          %s317 = scalar_lea.vmem %s3, %s316
        $region32: #{tpu_custom_call.1} parent=23 // pred_fallthru
          _
        // Predicated region
        $region33: #{tpu_custom_call.1} parent=23 // pred_check
          %p318 = pneg %p148
        $region34: #{tpu_custom_call.1} parent=23 // pred_check_branch
          %320 = sbr.rel (%p318) target = $region36
        $region35: #{tpu_custom_call.1} parent=23 // pred_region
          %p321 = scmp.lt.s32.totalorder %s25, 1
          %s322 = scalar_select %p321, %s25, 1
          %s323 = smul.addr %s322, 4
          %s324 = smul.addr %s323, 8
          %s325 = scalar_lea.vmem %s4, %s324
        $region36: #{tpu_custom_call.1} parent=23 // pred_fallthru
          _
        // Predicated region
        $region37: #{tpu_custom_call.1} parent=23 // pred_check
          %p326 = pneg %p174
        $region38: #{tpu_custom_call.1} parent=23 // pred_check_branch
          %328 = sbr.rel (%p326) target = $region40
        $region39: #{tpu_custom_call.1} parent=23 // pred_region
          %p329 = scmp.lt.s32.totalorder %s25, 1
          %s330 = scalar_select %p329, %s25, 1
          %s331 = smul.addr %s330, 4
          %s332 = smul.addr %s331, 8
          %s333 = scalar_lea.vmem %s5, %s332
        $region40: #{tpu_custom_call.1} parent=23 // pred_fallthru
          _
        // Predicated region
        $region41: #{tpu_custom_call.1} parent=23 // pred_check
          %p334 = pneg %p200
        $region42: #{tpu_custom_call.1} parent=23 // pred_check_branch
          %336 = sbr.rel (%p334) target = $region44
        $region43: #{tpu_custom_call.1} parent=23 // pred_region
          %p337 = scmp.lt.s32.totalorder %s25, 1
          %s338 = scalar_select %p337, %s25, 1
          %s339 = smul.addr %s338, 8
          %s340 = smul.addr %s339, 8
          %s341 = scalar_lea.vmem %s6, %s340
        $region44: #{tpu_custom_call.1} parent=23 // pred_fallthru
          _
        // Predicated region
        $region45: #{tpu_custom_call.1} parent=23 // pred_check
          %p342 = pneg %p226
        $region46: #{tpu_custom_call.1} parent=23 // pred_check_branch
          %344 = sbr.rel (%p342) target = $region48
        $region47: #{tpu_custom_call.1} parent=23 // pred_region
          %p345 = scmp.lt.s32.totalorder %s25, 1
          %s346 = scalar_select %p345, %s25, 1
          %s347 = smul.addr %s346, 8
          %s348 = scalar_lea.vmem %s7, %s347
        $region48: #{tpu_custom_call.1} parent=23 // pred_fallthru
          _
      $region24: #{tpu_custom_call.1} parent=5 // pred_fallthru
        _
      %p349 = scmp.le.s32.totalorder 1, %s17
      %p350 = scmp.lt.s32.totalorder %s17, 3
      %p351 = pnand %p349, %p350
      %p352 = pneg %p351
      // Predicated region
      $region49: #{tpu_custom_call.1} parent=5 // pred_check
        _
      $region50: #{tpu_custom_call.1} parent=5 // pred_check_branch
        %354 = sbr.rel (%p351) target = $region52
      $region51: #{tpu_custom_call.1} parent=5 // pred_region
        %s355 = ssub.s32 %s17, 1
        // Predicated region
        $region53: #{tpu_custom_call.1} parent=51 // pred_check
          %p356 = pneg %p55
        $region54: #{tpu_custom_call.1} parent=51 // pred_check_branch
          %358 = sbr.rel (%p356) target = $region56
        $region55: #{tpu_custom_call.1} parent=51 // pred_region
          %359 = dma.done [#allocation3], 256
        $region56: #{tpu_custom_call.1} parent=51 // pred_fallthru
          _
        // Predicated region
        $region57: #{tpu_custom_call.1} parent=51 // pred_check
          %p360 = pneg %p76
        $region58: #{tpu_custom_call.1} parent=51 // pred_check_branch
          %362 = sbr.rel (%p360) target = $region60
        $region59: #{tpu_custom_call.1} parent=51 // pred_region
          %363 = dma.done [#allocation6], 128
        $region60: #{tpu_custom_call.1} parent=51 // pred_fallthru
          _
        %p364 = pneg %p55
        %p365 = pneg %p52
        %p366 = pneg %p76
        %p367 = pneg %p73
        %p368 = scmp.lt.s32.totalorder %s27, 1
        %s369 = scalar_select %p368, %s27, 1
        %s370 = smul.addr %s369, 4
        %s371 = smul.addr %s370, 8
        %s372 = scalar_lea.vmem %s2, %s371
        %p373 = pneg %p102
        %p374 = pneg %p99
        %p375 = scmp.lt.s32.totalorder %s27, 1
        %s376 = scalar_select %p375, %s27, 1
        %s377 = scalar_lea.vmem %s3, %s376
        %p378 = pneg %p128
        %p379 = pneg %p125
        %p380 = scmp.lt.s32.totalorder %s27, 1
        %s381 = scalar_select %p380, %s27, 1
        %s382 = smul.addr %s381, 4
        %s383 = smul.addr %s382, 8
        %s384 = scalar_lea.vmem %s4, %s383
        %p385 = pneg %p154
        %p386 = pneg %p151
        %p387 = scmp.lt.s32.totalorder %s27, 1
        %s388 = scalar_select %p387, %s27, 1
        %s389 = smul.addr %s388, 4
        %s390 = smul.addr %s389, 8
        %s391 = scalar_lea.vmem %s5, %s390
        %p392 = pneg %p180
        %p393 = pneg %p177
        %p394 = scmp.lt.s32.totalorder %s27, 1
        %s395 = scalar_select %p394, %s27, 1
        %s396 = smul.addr %s395, 8
        %s397 = smul.addr %s396, 8
        %s398 = scalar_lea.vmem %s6, %s397
        %p399 = pneg %p206
        %p400 = pneg %p203
        %p401 = scmp.lt.s32.totalorder %s27, 1
        %s402 = scalar_select %p401, %s27, 1
        %s403 = smul.addr %s402, 8
        %s404 = scalar_lea.vmem %s7, %s403
        %p405 = pneg %p232
        %p406 = pneg %p229
        %p407 = pneg %p258
        %p408 = pneg %p255
        %s409 = smul.u32 2, %s26
        %p410 = scmp.lt.s32.totalorder %s27, 1
        %s411 = scalar_select %p410, %s27, 1
        %s412 = smul.addr %s411, 4
        %s413 = smul.addr %s412, 8
        %s414 = scalar_lea.vmem %s2, %s413
        %p415 = scmp.lt.s32.totalorder %s27, 1
        %s416 = scalar_select %p415, %s27, 1
        %s417 = scalar_lea.vmem %s3, %s416
        %p418 = scmp.lt.s32.totalorder %s27, 1
        %s419 = scalar_select %p418, %s27, 1
        %s420 = smul.addr %s419, 4
        %s421 = smul.addr %s420, 8
        %s422 = scalar_lea.vmem %s4, %s421
        %p423 = scmp.lt.s32.totalorder %s27, 1
        %s424 = scalar_select %p423, %s27, 1
        %s425 = smul.addr %s424, 4
        %s426 = smul.addr %s425, 8
        %s427 = scalar_lea.vmem %s5, %s426
        %p428 = scmp.lt.s32.totalorder %s27, 1
        %s429 = scalar_select %p428, %s27, 1
        %s430 = smul.addr %s429, 8
        %s431 = smul.addr %s430, 8
        %s432 = scalar_lea.vmem %s6, %s431
        %p433 = scmp.lt.s32.totalorder %s27, 1
        %s434 = scalar_select %p433, %s27, 1
        %s435 = smul.addr %s434, 8
        %s436 = scalar_lea.vmem %s7, %s435
        %s437 = smul.u32 2, %s26
        %p438 = scmp.eq.s32.totalorder %s27, 0
        // Predicated region
        $region61: #{tpu_custom_call.1} parent=51 // pred_check
          %p439 = pneg %p438
        $region62: #{tpu_custom_call.1} parent=51 // pred_check_branch
          %441 = sbr.rel (%p439) target = $region64
        $region63: #{tpu_custom_call.1} parent=51 // pred_region
          %v442 = vld [vmem:[#allocation2] sm:$0xff]
          %v443 = vld [vmem:[#allocation2 + $0x8] sm:$0xff]
          %v444 = vld [vmem:[#allocation5] sm:$0xff]
          %v445 = vadd.f32 %v442, %v444
          %v446 = vadd.f32 %v443, %v444
          %vm447 = vcmask 261120
          %448 = vst.msk [vmem:[#allocation7] sm:$0xff] %vm447, %v445
          %449 = vst.msk [vmem:[#allocation7 + $0x8] sm:$0xff] %vm447, %v446
        $region64: #{tpu_custom_call.1} parent=51 // pred_fallthru
          _
        %v450 = vld [vmem:[#allocation7] sm:$0xff]
        %v451 = vld [vmem:[#allocation7 + $0x8] sm:$0xff]
        %v452 = vld [vmem:[%s436] sm:$0xff]
        %v453 = vld [vmem:[%s414] sm:$0xff]
        %v454 = vld [vmem:[%s414 + $0x8] sm:$0xff]
        %v455 = vld [vmem:[%s414 + $0x10] sm:$0xff]
        %v456 = vld [vmem:[%s414 + $0x18] sm:$0xff]
        %v457 = vld [vmem:[%s417] sm:$0x1]
        %v459 = vlaneseq
        %v460 = vshrl.u32 %v459, 7
        %v461 = vsub.s32 0, %v460
        %v462 = vrot.slane %v457, %v461
        %vm464 = vcmask 261120
        %v466 = vsel %vm464, %v450, 0
        %v469 = vsel %vm464, %v451, 0
        %471 = vmatprep.subr.mxu0 0.0
        %472 = vmatpush1.msra.mxu0 %v453
        %473 = vmatprep.subr.mxu0 0.0
        %474 = vmatpush1.msra.mxu0 %v454
        %475 = vmatprep.subr.mxu0 0.0
        %476 = vmatpush1.msra.mxu0 %v455
        %477 = vmatprep.subr.mxu0 0.0
        %478 = vmatpush1.msra.mxu0 %v456
        %479 = vmatprep.subr.mxu0 0.0
        %480 = vmatpush1.msra.mxu0 0.0
        %481 = vmatprep.subr.mxu0 0.0
        %482 = vmatpush1.msra.mxu0 0.0
        %483 = vmatprep.subr.mxu0 0.0
        %484 = vmatpush1.msra.mxu0 0.0
        %485 = vmatprep.subr.mxu0 0.0
        %486 = vmatpush1.msra.mxu0 0.0
        %487 = vmatprep.subr.mxu0 0.0
        %488 = vmatpush1.msra.mxu0 0.0
        %489 = vmatprep.subr.mxu0 0.0
        %490 = vmatpush1.msra.mxu0 0.0
        %491 = vmatprep.subr.mxu0 0.0
        %492 = vmatpush1.msra.mxu0 0.0
        %493 = vmatprep.subr.mxu0 0.0
        %494 = vmatpush1.msra.mxu0 0.0
        %495 = vmatprep.subr.mxu0 0.0
        %496 = vmatpush1.msra.mxu0 0.0
        %497 = vmatprep.subr.mxu0 0.0
        %498 = vmatpush1.msra.mxu0 0.0
        %499 = vmatprep.subr.mxu0 0.0
        %500 = vmatpush1.msra.mxu0 0.0
        %501 = vmatprep.subr.mxu0 0.0
        %502 = vmatpush1.msra.mxu0 0.0
        %503 = vmatprep.subr.mxu0 0.0
        %504 = vmatpush1.msra.mxu0 0.0
        %505 = vmatprep.subr.mxu0 0.0
        %506 = vmatpush1.msra.mxu0 0.0
        %507 = vmatprep.subr.mxu0 0.0
        %508 = vmatpush1.msra.mxu0 0.0
        %509 = vmatprep.subr.mxu0 0.0
        %510 = vmatpush1.msra.mxu0 0.0
        %511 = vmatprep.subr.mxu0 0.0
        %512 = vmatpush1.msra.mxu0 0.0
        %513 = vmatprep.subr.mxu0 0.0
        %514 = vmatpush1.msra.mxu0 0.0
        %515 = vmatprep.subr.mxu0 0.0
        %516 = vmatpush1.msra.mxu0 0.0
        %517 = vmatprep.subr.mxu0 0.0
        %518 = vmatpush1.msra.mxu0 0.0
        %519 = vmatprep.subr.mxu0 0.0
        %520 = vmatpush1.msra.mxu0 0.0
        %521 = vmatprep.subr.mxu0 0.0
        %522 = vmatpush1.msra.mxu0 0.0
        %523 = vmatprep.subr.mxu0 0.0
        %524 = vmatpush1.msra.mxu0 0.0
        %525 = vmatprep.subr.mxu0 0.0
        %526 = vmatpush1.msra.mxu0 0.0
        %527 = vmatprep.subr.mxu0 0.0
        %528 = vmatpush1.msra.mxu0 0.0
        %529 = vmatprep.subr.mxu0 0.0
        %530 = vmatpush1.msra.mxu0 0.0
        %531 = vmatprep.subr.mxu0 0.0
        %532 = vmatpush1.msra.mxu0 0.0
        %533 = vmatprep.subr.mxu0 0.0
        %534 = vmatpush1.msra.mxu0 0.0
        %535 = vmatprep.mubr.f32.mxu0 0.0
        %536 = vmatmul.mubr.f32.gmra.mrb[0].mxu0 %v466
        %v537 = vpop.f32.mrb[0].mxu0
        %v538 = vadd.f32 %v462, %v537
        %v539 = vpop.f32.mrb[0].mxu0
        %540 = vmatprep.mubr.f32.mxu0 0.0
        %541 = vmatmul.mubr.f32.gmra.mrb[0].mxu0 %v469
        %v542 = vpop.f32.mrb[0].mxu0
        %v543 = vadd.f32 %v462, %v542
        %v544 = vpop.f32.mrb[0].mxu0
        %545 = vdwg.mxu0
        %547 = vrot.lane.b32.xlu0 %v538, 96
        %v548 = vpop.permute.xlu0 %547
        %vm549 = vcmask 64512
        %v550 = vsel %vm549, %v538, 0
        %v552 = vsel %vm549, %v548, 0
        %554 = vmatprep.subr.mxu0 0.0
        %555 = vmatpush1.xpose.msra.mxu0 %v552
        %556 = vmatprep.subr.mxu0 0.0
        %557 = vmatpush1.xpose.msra.mxu0 0.0
        %558 = vmatprep.subr.mxu0 0.0
        %559 = vmatpush1.xpose.msra.mxu0 0.0
        %560 = vmatprep.subr.mxu0 0.0
        %561 = vmatpush1.xpose.msra.mxu0 0.0
        %562 = vmatprep.subr.mxu0 0.0
        %563 = vmatpush1.xpose.msra.mxu0 0.0
        %564 = vmatprep.subr.mxu0 0.0
        %565 = vmatpush1.xpose.msra.mxu0 0.0
        %566 = vmatprep.subr.mxu0 0.0
        %567 = vmatpush1.xpose.msra.mxu0 0.0
        %568 = vmatprep.subr.mxu0 0.0
        %569 = vmatpush1.xpose.msra.mxu0 0.0
        %570 = vmatprep.subr.mxu0 0.0
        %571 = vmatpush1.xpose.msra.mxu0 0.0
        %572 = vmatprep.subr.mxu0 0.0
        %573 = vmatpush1.xpose.msra.mxu0 0.0
        %574 = vmatprep.subr.mxu0 0.0
        %575 = vmatpush1.xpose.msra.mxu0 0.0
        %576 = vmatprep.subr.mxu0 0.0
        %577 = vmatpush1.xpose.msra.mxu0 0.0
        %578 = vmatprep.subr.mxu0 0.0
        %579 = vmatpush1.xpose.msra.mxu0 0.0
        %580 = vmatprep.subr.mxu0 0.0
        %581 = vmatpush1.xpose.msra.mxu0 0.0
        %582 = vmatprep.subr.mxu0 0.0
        %583 = vmatpush1.xpose.msra.mxu0 0.0
        %584 = vmatprep.subr.mxu0 0.0
        %585 = vmatpush1.xpose.msra.mxu0 0.0
        %586 = vmatprep.subr.mxu0 0.0
        %587 = vmatpush1.xpose.msra.mxu0 0.0
        %588 = vmatprep.subr.mxu0 0.0
        %589 = vmatpush1.xpose.msra.mxu0 0.0
        %590 = vmatprep.subr.mxu0 0.0
        %591 = vmatpush1.xpose.msra.mxu0 0.0
        %592 = vmatprep.subr.mxu0 0.0
        %593 = vmatpush1.xpose.msra.mxu0 0.0
        %594 = vmatprep.subr.mxu0 0.0
        %595 = vmatpush1.xpose.msra.mxu0 0.0
        %596 = vmatprep.subr.mxu0 0.0
        %597 = vmatpush1.xpose.msra.mxu0 0.0
        %598 = vmatprep.subr.mxu0 0.0
        %599 = vmatpush1.xpose.msra.mxu0 0.0
        %600 = vmatprep.subr.mxu0 0.0
        %601 = vmatpush1.xpose.msra.mxu0 0.0
        %602 = vmatprep.subr.mxu0 0.0
        %603 = vmatpush1.xpose.msra.mxu0 0.0
        %604 = vmatprep.subr.mxu0 0.0
        %605 = vmatpush1.xpose.msra.mxu0 0.0
        %606 = vmatprep.subr.mxu0 0.0
        %607 = vmatpush1.xpose.msra.mxu0 0.0
        %608 = vmatprep.subr.mxu0 0.0
        %609 = vmatpush1.xpose.msra.mxu0 0.0
        %610 = vmatprep.subr.mxu0 0.0
        %611 = vmatpush1.xpose.msra.mxu0 0.0
        %612 = vmatprep.subr.mxu0 0.0
        %613 = vmatpush1.xpose.msra.mxu0 0.0
        %614 = vmatprep.subr.mxu0 0.0
        %615 = vmatpush1.xpose.msra.mxu0 0.0
        %616 = vmatprep.subr.mxu0 0.0
        %617 = vmatpush1.xpose.msra.mxu0 0.0
        %618 = vmatprep.mubr.f32.mxu0 0.0
        %619 = vmatmul.mubr.f32.gmra.mrb[0].mxu0 %v550
        %v620 = vpop.f32.mrb[0].mxu0
        %v621 = vadd.f32 0.0, %v620
        %v622 = vpop.f32.mrb[0].mxu0
        %623 = vdwg.mxu0
        %625 = vrot.lane.b32.xlu0 %v543, 96
        %v626 = vpop.permute.xlu0 %625
        %v627 = vsel %vm549, %v543, 0
        %v629 = vsel %vm549, %v626, 0
        %631 = vmatprep.subr.mxu0 0.0
        %632 = vmatpush1.xpose.msra.mxu0 %v629
        %633 = vmatprep.subr.mxu0 0.0
        %634 = vmatpush1.xpose.msra.mxu0 0.0
        %635 = vmatprep.subr.mxu0 0.0
        %636 = vmatpush1.xpose.msra.mxu0 0.0
        %637 = vmatprep.subr.mxu0 0.0
        %638 = vmatpush1.xpose.msra.mxu0 0.0
        %639 = vmatprep.subr.mxu0 0.0
        %640 = vmatpush1.xpose.msra.mxu0 0.0
        %641 = vmatprep.subr.mxu0 0.0
        %642 = vmatpush1.xpose.msra.mxu0 0.0
        %643 = vmatprep.subr.mxu0 0.0
        %644 = vmatpush1.xpose.msra.mxu0 0.0
        %645 = vmatprep.subr.mxu0 0.0
        %646 = vmatpush1.xpose.msra.mxu0 0.0
        %647 = vmatprep.subr.mxu0 0.0
        %648 = vmatpush1.xpose.msra.mxu0 0.0
        %649 = vmatprep.subr.mxu0 0.0
        %650 = vmatpush1.xpose.msra.mxu0 0.0
        %651 = vmatprep.subr.mxu0 0.0
        %652 = vmatpush1.xpose.msra.mxu0 0.0
        %653 = vmatprep.subr.mxu0 0.0
        %654 = vmatpush1.xpose.msra.mxu0 0.0
        %655 = vmatprep.subr.mxu0 0.0
        %656 = vmatpush1.xpose.msra.mxu0 0.0
        %657 = vmatprep.subr.mxu0 0.0
        %658 = vmatpush1.xpose.msra.mxu0 0.0
        %659 = vmatprep.subr.mxu0 0.0
        %660 = vmatpush1.xpose.msra.mxu0 0.0
        %661 = vmatprep.subr.mxu0 0.0
        %662 = vmatpush1.xpose.msra.mxu0 0.0
        %663 = vmatprep.subr.mxu0 0.0
        %664 = vmatpush1.xpose.msra.mxu0 0.0
        %665 = vmatprep.subr.mxu0 0.0
        %666 = vmatpush1.xpose.msra.mxu0 0.0
        %667 = vmatprep.subr.mxu0 0.0
        %668 = vmatpush1.xpose.msra.mxu0 0.0
        %669 = vmatprep.subr.mxu0 0.0
        %670 = vmatpush1.xpose.msra.mxu0 0.0
        %671 = vmatprep.subr.mxu0 0.0
        %672 = vmatpush1.xpose.msra.mxu0 0.0
        %673 = vmatprep.subr.mxu0 0.0
        %674 = vmatpush1.xpose.msra.mxu0 0.0
        %675 = vmatprep.subr.mxu0 0.0
        %676 = vmatpush1.xpose.msra.mxu0 0.0
        %677 = vmatprep.subr.mxu0 0.0
        %678 = vmatpush1.xpose.msra.mxu0 0.0
        %679 = vmatprep.subr.mxu0 0.0
        %680 = vmatpush1.xpose.msra.mxu0 0.0
        %681 = vmatprep.subr.mxu0 0.0
        %682 = vmatpush1.xpose.msra.mxu0 0.0
        %683 = vmatprep.subr.mxu0 0.0
        %684 = vmatpush1.xpose.msra.mxu0 0.0
        %685 = vmatprep.subr.mxu0 0.0
        %686 = vmatpush1.xpose.msra.mxu0 0.0
        %687 = vmatprep.subr.mxu0 0.0
        %688 = vmatpush1.xpose.msra.mxu0 0.0
        %689 = vmatprep.subr.mxu0 0.0
        %690 = vmatpush1.xpose.msra.mxu0 0.0
        %691 = vmatprep.subr.mxu0 0.0
        %692 = vmatpush1.xpose.msra.mxu0 0.0
        %693 = vmatprep.subr.mxu0 0.0
        %694 = vmatpush1.xpose.msra.mxu0 0.0
        %695 = vmatprep.mubr.f32.mxu0 0.0
        %696 = vmatmul.mubr.f32.gmra.mrb[0].mxu0 %v627
        %v697 = vpop.f32.mrb[0].mxu0
        %v698 = vadd.f32 0.0, %v697
        %v699 = vpop.f32.mrb[0].mxu0
        %700 = vdwg.mxu0
        %v701 = vsel %vm549, %v621, -inf
        %702 = vmax.xlane.f32.xlu0 %v701
        %v703 = vpop.xlane.xlu0 %702
        %v704 = vsel %vm549, %v698, -inf
        %705 = vmax.xlane.f32.xlu0 %v704
        %v706 = vpop.xlane.xlu0 %705
        %v707 = vsub.f32 %v621, %v703
        %v708 = vsub.f32 %v698, %v706
        %v709 = vmul.f32 %v707, 1.442695
        %v710 = vpow.pop %v709
        %v711 = vmul.f32 %v708, 1.442695
        %v712 = vpow.pop %v711
        %v713 = vsel %vm549, %v710, 0.0
        %714 = vadd.xlane.f32.xlu0 %v713
        %v715 = vpop.xlane.xlu0 %714
        %v716 = vsel %vm549, %v712, 0.0
        %717 = vadd.xlane.f32.xlu0 %v716
        %v718 = vpop.xlane.xlu0 %717
        %v719 = vrcp.pop %v715
        %v720 = vrcp.pop %v718
        %v721 = vmul.f32 %v710, %v719
        %v722 = vmul.f32 %v712, %v720
        %723 = vrot.lane.b32.xlu0 %v538, 64
        %v724 = vpop.permute.xlu0 %723
        %v727 = vsel %vm549, %v721, 0
        %729 = vmatprep.subr.mxu0 0.0
        %730 = vmatpush1.msra.mxu0 %v724
        %731 = vmatprep.subr.mxu0 0.0
        %732 = vmatpush1.msra.mxu0 0.0
        %733 = vmatprep.subr.mxu0 0.0
        %734 = vmatpush1.msra.mxu0 0.0
        %735 = vmatprep.subr.mxu0 0.0
        %736 = vmatpush1.msra.mxu0 0.0
        %737 = vmatprep.subr.mxu0 0.0
        %738 = vmatpush1.msra.mxu0 0.0
        %739 = vmatprep.subr.mxu0 0.0
        %740 = vmatpush1.msra.mxu0 0.0
        %741 = vmatprep.subr.mxu0 0.0
        %742 = vmatpush1.msra.mxu0 0.0
        %743 = vmatprep.subr.mxu0 0.0
        %744 = vmatpush1.msra.mxu0 0.0
        %745 = vmatprep.subr.mxu0 0.0
        %746 = vmatpush1.msra.mxu0 0.0
        %747 = vmatprep.subr.mxu0 0.0
        %748 = vmatpush1.msra.mxu0 0.0
        %749 = vmatprep.subr.mxu0 0.0
        %750 = vmatpush1.msra.mxu0 0.0
        %751 = vmatprep.subr.mxu0 0.0
        %752 = vmatpush1.msra.mxu0 0.0
        %753 = vmatprep.subr.mxu0 0.0
        %754 = vmatpush1.msra.mxu0 0.0
        %755 = vmatprep.subr.mxu0 0.0
        %756 = vmatpush1.msra.mxu0 0.0
        %757 = vmatprep.subr.mxu0 0.0
        %758 = vmatpush1.msra.mxu0 0.0
        %759 = vmatprep.subr.mxu0 0.0
        %760 = vmatpush1.msra.mxu0 0.0
        %761 = vmatprep.subr.mxu0 0.0
        %762 = vmatpush1.msra.mxu0 0.0
        %763 = vmatprep.subr.mxu0 0.0
        %764 = vmatpush1.msra.mxu0 0.0
        %765 = vmatprep.subr.mxu0 0.0
        %766 = vmatpush1.msra.mxu0 0.0
        %767 = vmatprep.subr.mxu0 0.0
        %768 = vmatpush1.msra.mxu0 0.0
        %769 = vmatprep.subr.mxu0 0.0
        %770 = vmatpush1.msra.mxu0 0.0
        %771 = vmatprep.subr.mxu0 0.0
        %772 = vmatpush1.msra.mxu0 0.0
        %773 = vmatprep.subr.mxu0 0.0
        %774 = vmatpush1.msra.mxu0 0.0
        %775 = vmatprep.subr.mxu0 0.0
        %776 = vmatpush1.msra.mxu0 0.0
        %777 = vmatprep.subr.mxu0 0.0
        %778 = vmatpush1.msra.mxu0 0.0
        %779 = vmatprep.subr.mxu0 0.0
        %780 = vmatpush1.msra.mxu0 0.0
        %781 = vmatprep.subr.mxu0 0.0
        %782 = vmatpush1.msra.mxu0 0.0
        %783 = vmatprep.subr.mxu0 0.0
        %784 = vmatpush1.msra.mxu0 0.0
        %785 = vmatprep.subr.mxu0 0.0
        %786 = vmatpush1.msra.mxu0 0.0
        %787 = vmatprep.subr.mxu0 0.0
        %788 = vmatpush1.msra.mxu0 0.0
        %789 = vmatprep.subr.mxu0 0.0
        %790 = vmatpush1.msra.mxu0 0.0
        %791 = vmatprep.subr.mxu0 0.0
        %792 = vmatpush1.msra.mxu0 0.0
        %793 = vmatprep.mubr.f32.mxu0 0.0
        %794 = vmatmul.mubr.f32.gmra.mrb[0].mxu0 %v727
        %v795 = vpop.f32.mrb[0].mxu0
        %v796 = vadd.f32 0.0, %v795
        %v797 = vpop.f32.mrb[0].mxu0
        %798 = vdwg.mxu0
        %799 = vrot.lane.b32.xlu0 %v543, 64
        %v800 = vpop.permute.xlu0 %799
        %v803 = vsel %vm549, %v722, 0
        %805 = vmatprep.subr.mxu0 0.0
        %806 = vmatpush1.msra.mxu0 %v800
        %807 = vmatprep.subr.mxu0 0.0
        %808 = vmatpush1.msra.mxu0 0.0
        %809 = vmatprep.subr.mxu0 0.0
        %810 = vmatpush1.msra.mxu0 0.0
        %811 = vmatprep.subr.mxu0 0.0
        %812 = vmatpush1.msra.mxu0 0.0
        %813 = vmatprep.subr.mxu0 0.0
        %814 = vmatpush1.msra.mxu0 0.0
        %815 = vmatprep.subr.mxu0 0.0
        %816 = vmatpush1.msra.mxu0 0.0
        %817 = vmatprep.subr.mxu0 0.0
        %818 = vmatpush1.msra.mxu0 0.0
        %819 = vmatprep.subr.mxu0 0.0
        %820 = vmatpush1.msra.mxu0 0.0
        %821 = vmatprep.subr.mxu0 0.0
        %822 = vmatpush1.msra.mxu0 0.0
        %823 = vmatprep.subr.mxu0 0.0
        %824 = vmatpush1.msra.mxu0 0.0
        %825 = vmatprep.subr.mxu0 0.0
        %826 = vmatpush1.msra.mxu0 0.0
        %827 = vmatprep.subr.mxu0 0.0
        %828 = vmatpush1.msra.mxu0 0.0
        %829 = vmatprep.subr.mxu0 0.0
        %830 = vmatpush1.msra.mxu0 0.0
        %831 = vmatprep.subr.mxu0 0.0
        %832 = vmatpush1.msra.mxu0 0.0
        %833 = vmatprep.subr.mxu0 0.0
        %834 = vmatpush1.msra.mxu0 0.0
        %835 = vmatprep.subr.mxu0 0.0
        %836 = vmatpush1.msra.mxu0 0.0
        %837 = vmatprep.subr.mxu0 0.0
        %838 = vmatpush1.msra.mxu0 0.0
        %839 = vmatprep.subr.mxu0 0.0
        %840 = vmatpush1.msra.mxu0 0.0
        %841 = vmatprep.subr.mxu0 0.0
        %842 = vmatpush1.msra.mxu0 0.0
        %843 = vmatprep.subr.mxu0 0.0
        %844 = vmatpush1.msra.mxu0 0.0
        %845 = vmatprep.subr.mxu0 0.0
        %846 = vmatpush1.msra.mxu0 0.0
        %847 = vmatprep.subr.mxu0 0.0
        %848 = vmatpush1.msra.mxu0 0.0
        %849 = vmatprep.subr.mxu0 0.0
        %850 = vmatpush1.msra.mxu0 0.0
        %851 = vmatprep.subr.mxu0 0.0
        %852 = vmatpush1.msra.mxu0 0.0
        %853 = vmatprep.subr.mxu0 0.0
        %854 = vmatpush1.msra.mxu0 0.0
        %855 = vmatprep.subr.mxu0 0.0
        %856 = vmatpush1.msra.mxu0 0.0
        %857 = vmatprep.subr.mxu0 0.0
        %858 = vmatpush1.msra.mxu0 0.0
        %859 = vmatprep.subr.mxu0 0.0
        %860 = vmatpush1.msra.mxu0 0.0
        %861 = vmatprep.subr.mxu0 0.0
        %862 = vmatpush1.msra.mxu0 0.0
        %863 = vmatprep.subr.mxu0 0.0
        %864 = vmatpush1.msra.mxu0 0.0
        %865 = vmatprep.subr.mxu0 0.0
        %866 = vmatpush1.msra.mxu0 0.0
        %867 = vmatprep.subr.mxu0 0.0
        %868 = vmatpush1.msra.mxu0 0.0
        %869 = vmatprep.mubr.f32.mxu0 0.0
        %870 = vmatmul.mubr.f32.gmra.mrb[0].mxu0 %v803
        %v871 = vpop.f32.mrb[0].mxu0
        %v872 = vadd.f32 0.0, %v871
        %v873 = vpop.f32.mrb[0].mxu0
        %874 = vdwg.mxu0
        %v875 = vld [vmem:[%s422] sm:$0xff]
        %876 = vrot.lane.b32.xlu0 %v538, 120
        %v877 = vpop.permute.xlu0 %876
        %878 = vrot.lane.b32.xlu0 %v538, 88
        %v879 = vpop.permute.xlu0 %878
        %v880 = vsel %vm549, %v877, 0
        %v882 = vsel %vm549, %v879, 0
        %884 = vmatprep.subr.mxu0 0.0
        %885 = vmatpush1.xpose.msra.mxu0 %v882
        %886 = vmatprep.subr.mxu0 0.0
        %887 = vmatpush1.xpose.msra.mxu0 0.0
        %888 = vmatprep.subr.mxu0 0.0
        %889 = vmatpush1.xpose.msra.mxu0 0.0
        %890 = vmatprep.subr.mxu0 0.0
        %891 = vmatpush1.xpose.msra.mxu0 0.0
        %892 = vmatprep.subr.mxu0 0.0
        %893 = vmatpush1.xpose.msra.mxu0 0.0
        %894 = vmatprep.subr.mxu0 0.0
        %895 = vmatpush1.xpose.msra.mxu0 0.0
        %896 = vmatprep.subr.mxu0 0.0
        %897 = vmatpush1.xpose.msra.mxu0 0.0
        %898 = vmatprep.subr.mxu0 0.0
        %899 = vmatpush1.xpose.msra.mxu0 0.0
        %900 = vmatprep.subr.mxu0 0.0
        %901 = vmatpush1.xpose.msra.mxu0 0.0
        %902 = vmatprep.subr.mxu0 0.0
        %903 = vmatpush1.xpose.msra.mxu0 0.0
        %904 = vmatprep.subr.mxu0 0.0
        %905 = vmatpush1.xpose.msra.mxu0 0.0
        %906 = vmatprep.subr.mxu0 0.0
        %907 = vmatpush1.xpose.msra.mxu0 0.0
        %908 = vmatprep.subr.mxu0 0.0
        %909 = vmatpush1.xpose.msra.mxu0 0.0
        %910 = vmatprep.subr.mxu0 0.0
        %911 = vmatpush1.xpose.msra.mxu0 0.0
        %912 = vmatprep.subr.mxu0 0.0
        %913 = vmatpush1.xpose.msra.mxu0 0.0
        %914 = vmatprep.subr.mxu0 0.0
        %915 = vmatpush1.xpose.msra.mxu0 0.0
        %916 = vmatprep.subr.mxu0 0.0
        %917 = vmatpush1.xpose.msra.mxu0 0.0
        %918 = vmatprep.subr.mxu0 0.0
        %919 = vmatpush1.xpose.msra.mxu0 0.0
        %920 = vmatprep.subr.mxu0 0.0
        %921 = vmatpush1.xpose.msra.mxu0 0.0
        %922 = vmatprep.subr.mxu0 0.0
        %923 = vmatpush1.xpose.msra.mxu0 0.0
        %924 = vmatprep.subr.mxu0 0.0
        %925 = vmatpush1.xpose.msra.mxu0 0.0
        %926 = vmatprep.subr.mxu0 0.0
        %927 = vmatpush1.xpose.msra.mxu0 0.0
        %928 = vmatprep.subr.mxu0 0.0
        %929 = vmatpush1.xpose.msra.mxu0 0.0
        %930 = vmatprep.subr.mxu0 0.0
        %931 = vmatpush1.xpose.msra.mxu0 0.0
        %932 = vmatprep.subr.mxu0 0.0
        %933 = vmatpush1.xpose.msra.mxu0 0.0
        %934 = vmatprep.subr.mxu0 0.0
        %935 = vmatpush1.xpose.msra.mxu0 0.0
        %936 = vmatprep.subr.mxu0 0.0
        %937 = vmatpush1.xpose.msra.mxu0 0.0
        %938 = vmatprep.subr.mxu0 0.0
        %939 = vmatpush1.xpose.msra.mxu0 0.0
        %940 = vmatprep.subr.mxu0 0.0
        %941 = vmatpush1.xpose.msra.mxu0 0.0
        %942 = vmatprep.subr.mxu0 0.0
        %943 = vmatpush1.xpose.msra.mxu0 0.0
        %944 = vmatprep.subr.mxu0 0.0
        %945 = vmatpush1.xpose.msra.mxu0 0.0
        %946 = vmatprep.subr.mxu0 0.0
        %947 = vmatpush1.xpose.msra.mxu0 0.0
        %948 = vmatprep.mubr.f32.mxu0 0.0
        %949 = vmatmul.mubr.f32.gmra.mrb[0].mxu0 %v880
        %v950 = vpop.f32.mrb[0].mxu0
        %v951 = vadd.f32 0.0, %v950
        %v952 = vpop.f32.mrb[0].mxu0
        %953 = vdwg.mxu0
        %954 = vrot.lane.b32.xlu0 %v543, 120
        %v955 = vpop.permute.xlu0 %954
        %956 = vrot.lane.b32.xlu0 %v543, 88
        %v957 = vpop.permute.xlu0 %956
        %v958 = vsel %vm549, %v955, 0
        %v960 = vsel %vm549, %v957, 0
        %962 = vmatprep.subr.mxu0 0.0
        %963 = vmatpush1.xpose.msra.mxu0 %v960
        %964 = vmatprep.subr.mxu0 0.0
        %965 = vmatpush1.xpose.msra.mxu0 0.0
        %966 = vmatprep.subr.mxu0 0.0
        %967 = vmatpush1.xpose.msra.mxu0 0.0
        %968 = vmatprep.subr.mxu0 0.0
        %969 = vmatpush1.xpose.msra.mxu0 0.0
        %970 = vmatprep.subr.mxu0 0.0
        %971 = vmatpush1.xpose.msra.mxu0 0.0
        %972 = vmatprep.subr.mxu0 0.0
        %973 = vmatpush1.xpose.msra.mxu0 0.0
        %974 = vmatprep.subr.mxu0 0.0
        %975 = vmatpush1.xpose.msra.mxu0 0.0
        %976 = vmatprep.subr.mxu0 0.0
        %977 = vmatpush1.xpose.msra.mxu0 0.0
        %978 = vmatprep.subr.mxu0 0.0
        %979 = vmatpush1.xpose.msra.mxu0 0.0
        %980 = vmatprep.subr.mxu0 0.0
        %981 = vmatpush1.xpose.msra.mxu0 0.0
        %982 = vmatprep.subr.mxu0 0.0
        %983 = vmatpush1.xpose.msra.mxu0 0.0
        %984 = vmatprep.subr.mxu0 0.0
        %985 = vmatpush1.xpose.msra.mxu0 0.0
        %986 = vmatprep.subr.mxu0 0.0
        %987 = vmatpush1.xpose.msra.mxu0 0.0
        %988 = vmatprep.subr.mxu0 0.0
        %989 = vmatpush1.xpose.msra.mxu0 0.0
        %990 = vmatprep.subr.mxu0 0.0
        %991 = vmatpush1.xpose.msra.mxu0 0.0
        %992 = vmatprep.subr.mxu0 0.0
        %993 = vmatpush1.xpose.msra.mxu0 0.0
        %994 = vmatprep.subr.mxu0 0.0
        %995 = vmatpush1.xpose.msra.mxu0 0.0
        %996 = vmatprep.subr.mxu0 0.0
        %997 = vmatpush1.xpose.msra.mxu0 0.0
        %998 = vmatprep.subr.mxu0 0.0
        %999 = vmatpush1.xpose.msra.mxu0 0.0
        %1000 = vmatprep.subr.mxu0 0.0
        %1001 = vmatpush1.xpose.msra.mxu0 0.0
        %1002 = vmatprep.subr.mxu0 0.0
        %1003 = vmatpush1.xpose.msra.mxu0 0.0
        %1004 = vmatprep.subr.mxu0 0.0
        %1005 = vmatpush1.xpose.msra.mxu0 0.0
        %1006 = vmatprep.subr.mxu0 0.0
        %1007 = vmatpush1.xpose.msra.mxu0 0.0
        %1008 = vmatprep.subr.mxu0 0.0
        %1009 = vmatpush1.xpose.msra.mxu0 0.0
        %1010 = vmatprep.subr.mxu0 0.0
        %1011 = vmatpush1.xpose.msra.mxu0 0.0
        %1012 = vmatprep.subr.mxu0 0.0
        %1013 = vmatpush1.xpose.msra.mxu0 0.0
        %1014 = vmatprep.subr.mxu0 0.0
        %1015 = vmatpush1.xpose.msra.mxu0 0.0
        %1016 = vmatprep.subr.mxu0 0.0
        %1017 = vmatpush1.xpose.msra.mxu0 0.0
        %1018 = vmatprep.subr.mxu0 0.0
        %1019 = vmatpush1.xpose.msra.mxu0 0.0
        %1020 = vmatprep.subr.mxu0 0.0
        %1021 = vmatpush1.xpose.msra.mxu0 0.0
        %1022 = vmatprep.subr.mxu0 0.0
        %1023 = vmatpush1.xpose.msra.mxu0 0.0
        %1024 = vmatprep.subr.mxu0 0.0
        %1025 = vmatpush1.xpose.msra.mxu0 0.0
        %1026 = vmatprep.mubr.f32.mxu0 0.0
        %1027 = vmatmul.mubr.f32.gmra.mrb[0].mxu0 %v958
        %v1028 = vpop.f32.mrb[0].mxu0
        %v1029 = vadd.f32 0.0, %v1028
        %v1030 = vpop.f32.mrb[0].mxu0
        %1031 = vdwg.mxu0
        %v1032 = vsel %vm549, %v951, -inf
        %1033 = vmax.xlane.f32.xlu0 %v1032
        %v1034 = vpop.xlane.xlu0 %1033
        %v1035 = vsel %vm549, %v1029, -inf
        %1036 = vmax.xlane.f32.xlu0 %v1035
        %v1037 = vpop.xlane.xlu0 %1036
        %v1038 = vsub.f32 %v951, %v1034
        %v1039 = vsub.f32 %v1029, %v1037
        %v1040 = vmul.f32 %v1038, 1.442695
        %v1041 = vpow.pop %v1040
        %v1042 = vmul.f32 %v1039, 1.442695
        %v1043 = vpow.pop %v1042
        %v1044 = vsel %vm549, %v1041, 0.0
        %1045 = vadd.xlane.f32.xlu0 %v1044
        %v1046 = vpop.xlane.xlu0 %1045
        %v1047 = vsel %vm549, %v1043, 0.0
        %1048 = vadd.xlane.f32.xlu0 %v1047
        %v1049 = vpop.xlane.xlu0 %1048
        %v1050 = vrcp.pop %v1046
        %v1051 = vrcp.pop %v1049
        %v1052 = vmul.f32 %v1041, %v1050
        %v1053 = vmul.f32 %v1043, %v1051
        %1054 = vrot.lane.b32.xlu0 %v538, 56
        %v1055 = vpop.permute.xlu0 %1054
        %v1058 = vsel %vm549, %v1052, 0
        %1060 = vmatprep.subr.mxu0 0.0
        %1061 = vmatpush1.msra.mxu0 %v1055
        %1062 = vmatprep.subr.mxu0 0.0
        %1063 = vmatpush1.msra.mxu0 0.0
        %1064 = vmatprep.subr.mxu0 0.0
        %1065 = vmatpush1.msra.mxu0 0.0
        %1066 = vmatprep.subr.mxu0 0.0
        %1067 = vmatpush1.msra.mxu0 0.0
        %1068 = vmatprep.subr.mxu0 0.0
        %1069 = vmatpush1.msra.mxu0 0.0
        %1070 = vmatprep.subr.mxu0 0.0
        %1071 = vmatpush1.msra.mxu0 0.0
        %1072 = vmatprep.subr.mxu0 0.0
        %1073 = vmatpush1.msra.mxu0 0.0
        %1074 = vmatprep.subr.mxu0 0.0
        %1075 = vmatpush1.msra.mxu0 0.0
        %1076 = vmatprep.subr.mxu0 0.0
        %1077 = vmatpush1.msra.mxu0 0.0
        %1078 = vmatprep.subr.mxu0 0.0
        %1079 = vmatpush1.msra.mxu0 0.0
        %1080 = vmatprep.subr.mxu0 0.0
        %1081 = vmatpush1.msra.mxu0 0.0
        %1082 = vmatprep.subr.mxu0 0.0
        %1083 = vmatpush1.msra.mxu0 0.0
        %1084 = vmatprep.subr.mxu0 0.0
        %1085 = vmatpush1.msra.mxu0 0.0
        %1086 = vmatprep.subr.mxu0 0.0
        %1087 = vmatpush1.msra.mxu0 0.0
        %1088 = vmatprep.subr.mxu0 0.0
        %1089 = vmatpush1.msra.mxu0 0.0
        %1090 = vmatprep.subr.mxu0 0.0
        %1091 = vmatpush1.msra.mxu0 0.0
        %1092 = vmatprep.subr.mxu0 0.0
        %1093 = vmatpush1.msra.mxu0 0.0
        %1094 = vmatprep.subr.mxu0 0.0
        %1095 = vmatpush1.msra.mxu0 0.0
        %1096 = vmatprep.subr.mxu0 0.0
        %1097 = vmatpush1.msra.mxu0 0.0
        %1098 = vmatprep.subr.mxu0 0.0
        %1099 = vmatpush1.msra.mxu0 0.0
        %1100 = vmatprep.subr.mxu0 0.0
        %1101 = vmatpush1.msra.mxu0 0.0
        %1102 = vmatprep.subr.mxu0 0.0
        %1103 = vmatpush1.msra.mxu0 0.0
        %1104 = vmatprep.subr.mxu0 0.0
        %1105 = vmatpush1.msra.mxu0 0.0
        %1106 = vmatprep.subr.mxu0 0.0
        %1107 = vmatpush1.msra.mxu0 0.0
        %1108 = vmatprep.subr.mxu0 0.0
        %1109 = vmatpush1.msra.mxu0 0.0
        %1110 = vmatprep.subr.mxu0 0.0
        %1111 = vmatpush1.msra.mxu0 0.0
        %1112 = vmatprep.subr.mxu0 0.0
        %1113 = vmatpush1.msra.mxu0 0.0
        %1114 = vmatprep.subr.mxu0 0.0
        %1115 = vmatpush1.msra.mxu0 0.0
        %1116 = vmatprep.subr.mxu0 0.0
        %1117 = vmatpush1.msra.mxu0 0.0
        %1118 = vmatprep.subr.mxu0 0.0
        %1119 = vmatpush1.msra.mxu0 0.0
        %1120 = vmatprep.subr.mxu0 0.0
        %1121 = vmatpush1.msra.mxu0 0.0
        %1122 = vmatprep.subr.mxu0 0.0
        %1123 = vmatpush1.msra.mxu0 0.0
        %1124 = vmatprep.mubr.f32.mxu0 0.0
        %1125 = vmatmul.mubr.f32.gmra.mrb[0].mxu0 %v1058
        %v1126 = vpop.f32.mrb[0].mxu0
        %v1127 = vadd.f32 0.0, %v1126
        %v1128 = vpop.f32.mrb[0].mxu0
        %1129 = vdwg.mxu0
        %1130 = vrot.lane.b32.xlu0 %v543, 56
        %v1131 = vpop.permute.xlu0 %1130
        %v1134 = vsel %vm549, %v1053, 0
        %1136 = vmatprep.subr.mxu0 0.0
        %1137 = vmatpush1.msra.mxu0 %v1131
        %1138 = vmatprep.subr.mxu0 0.0
        %1139 = vmatpush1.msra.mxu0 0.0
        %1140 = vmatprep.subr.mxu0 0.0
        %1141 = vmatpush1.msra.mxu0 0.0
        %1142 = vmatprep.subr.mxu0 0.0
        %1143 = vmatpush1.msra.mxu0 0.0
        %1144 = vmatprep.subr.mxu0 0.0
        %1145 = vmatpush1.msra.mxu0 0.0
        %1146 = vmatprep.subr.mxu0 0.0
        %1147 = vmatpush1.msra.mxu0 0.0
        %1148 = vmatprep.subr.mxu0 0.0
        %1149 = vmatpush1.msra.mxu0 0.0
        %1150 = vmatprep.subr.mxu0 0.0
        %1151 = vmatpush1.msra.mxu0 0.0
        %1152 = vmatprep.subr.mxu0 0.0
        %1153 = vmatpush1.msra.mxu0 0.0
        %1154 = vmatprep.subr.mxu0 0.0
        %1155 = vmatpush1.msra.mxu0 0.0
        %1156 = vmatprep.subr.mxu0 0.0
        %1157 = vmatpush1.msra.mxu0 0.0
        %1158 = vmatprep.subr.mxu0 0.0
        %1159 = vmatpush1.msra.mxu0 0.0
        %1160 = vmatprep.subr.mxu0 0.0
        %1161 = vmatpush1.msra.mxu0 0.0
        %1162 = vmatprep.subr.mxu0 0.0
        %1163 = vmatpush1.msra.mxu0 0.0
        %1164 = vmatprep.subr.mxu0 0.0
        %1165 = vmatpush1.msra.mxu0 0.0
        %1166 = vmatprep.subr.mxu0 0.0
        %1167 = vmatpush1.msra.mxu0 0.0
        %1168 = vmatprep.subr.mxu0 0.0
        %1169 = vmatpush1.msra.mxu0 0.0
        %1170 = vmatprep.subr.mxu0 0.0
        %1171 = vmatpush1.msra.mxu0 0.0
        %1172 = vmatprep.subr.mxu0 0.0
        %1173 = vmatpush1.msra.mxu0 0.0
        %1174 = vmatprep.subr.mxu0 0.0
        %1175 = vmatpush1.msra.mxu0 0.0
        %1176 = vmatprep.subr.mxu0 0.0
        %1177 = vmatpush1.msra.mxu0 0.0
        %1178 = vmatprep.subr.mxu0 0.0
        %1179 = vmatpush1.msra.mxu0 0.0
        %1180 = vmatprep.subr.mxu0 0.0
        %1181 = vmatpush1.msra.mxu0 0.0
        %1182 = vmatprep.subr.mxu0 0.0
        %1183 = vmatpush1.msra.mxu0 0.0
        %1184 = vmatprep.subr.mxu0 0.0
        %1185 = vmatpush1.msra.mxu0 0.0
        %1186 = vmatprep.subr.mxu0 0.0
        %1187 = vmatpush1.msra.mxu0 0.0
        %1188 = vmatprep.subr.mxu0 0.0
        %1189 = vmatpush1.msra.mxu0 0.0
        %1190 = vmatprep.subr.mxu0 0.0
        %1191 = vmatpush1.msra.mxu0 0.0
        %1192 = vmatprep.subr.mxu0 0.0
        %1193 = vmatpush1.msra.mxu0 0.0
        %1194 = vmatprep.subr.mxu0 0.0
        %1195 = vmatpush1.msra.mxu0 0.0
        %1196 = vmatprep.subr.mxu0 0.0
        %1197 = vmatpush1.msra.mxu0 0.0
        %1198 = vmatprep.subr.mxu0 0.0
        %1199 = vmatpush1.msra.mxu0 0.0
        %1200 = vmatprep.mubr.f32.mxu0 0.0
        %1201 = vmatmul.mubr.f32.gmra.mrb[0].mxu0 %v1134
        %v1202 = vpop.f32.mrb[0].mxu0
        %v1203 = vadd.f32 0.0, %v1202
        %v1204 = vpop.f32.mrb[0].mxu0
        %1205 = vdwg.mxu0
        %s1206 = scalar_lea.vmem %s422, 8
        %v1207 = vld [vmem:[%s1206] sm:$0xff]
        %v1209 = vsel %vm549, %v1127, 0
        %v1212 = vsel %vm549, %v1203, 0
        %1214 = vmatprep.subr.mxu0 0.0
        %1215 = vmatpush1.msra.mxu0 %v1207
        %1216 = vmatprep.subr.mxu0 0.0
        %1217 = vmatpush1.msra.mxu0 0.0
        %1218 = vmatprep.subr.mxu0 0.0
        %1219 = vmatpush1.msra.mxu0 0.0
        %1220 = vmatprep.subr.mxu0 0.0
        %1221 = vmatpush1.msra.mxu0 0.0
        %1222 = vmatprep.subr.mxu0 0.0
        %1223 = vmatpush1.msra.mxu0 0.0
        %1224 = vmatprep.subr.mxu0 0.0
        %1225 = vmatpush1.msra.mxu0 0.0
        %1226 = vmatprep.subr.mxu0 0.0
        %1227 = vmatpush1.msra.mxu0 0.0
        %1228 = vmatprep.subr.mxu0 0.0
        %1229 = vmatpush1.msra.mxu0 0.0
        %1230 = vmatprep.subr.mxu0 0.0
        %1231 = vmatpush1.msra.mxu0 0.0
        %1232 = vmatprep.subr.mxu0 0.0
        %1233 = vmatpush1.msra.mxu0 0.0
        %1234 = vmatprep.subr.mxu0 0.0
        %1235 = vmatpush1.msra.mxu0 0.0
        %1236 = vmatprep.subr.mxu0 0.0
        %1237 = vmatpush1.msra.mxu0 0.0
        %1238 = vmatprep.subr.mxu0 0.0
        %1239 = vmatpush1.msra.mxu0 0.0
        %1240 = vmatprep.subr.mxu0 0.0
        %1241 = vmatpush1.msra.mxu0 0.0
        %1242 = vmatprep.subr.mxu0 0.0
        %1243 = vmatpush1.msra.mxu0 0.0
        %1244 = vmatprep.subr.mxu0 0.0
        %1245 = vmatpush1.msra.mxu0 0.0
        %1246 = vmatprep.subr.mxu0 0.0
        %1247 = vmatpush1.msra.mxu0 0.0
        %1248 = vmatprep.subr.mxu0 0.0
        %1249 = vmatpush1.msra.mxu0 0.0
        %1250 = vmatprep.subr.mxu0 0.0
        %1251 = vmatpush1.msra.mxu0 0.0
        %1252 = vmatprep.subr.mxu0 0.0
        %1253 = vmatpush1.msra.mxu0 0.0
        %1254 = vmatprep.subr.mxu0 0.0
        %1255 = vmatpush1.msra.mxu0 0.0
        %1256 = vmatprep.subr.mxu0 0.0
        %1257 = vmatpush1.msra.mxu0 0.0
        %1258 = vmatprep.subr.mxu0 0.0
        %1259 = vmatpush1.msra.mxu0 0.0
        %1260 = vmatprep.subr.mxu0 0.0
        %1261 = vmatpush1.msra.mxu0 0.0
        %1262 = vmatprep.subr.mxu0 0.0
        %1263 = vmatpush1.msra.mxu0 0.0
        %1264 = vmatprep.subr.mxu0 0.0
        %1265 = vmatpush1.msra.mxu0 0.0
        %1266 = vmatprep.subr.mxu0 0.0
        %1267 = vmatpush1.msra.mxu0 0.0
        %1268 = vmatprep.subr.mxu0 0.0
        %1269 = vmatpush1.msra.mxu0 0.0
        %1270 = vmatprep.subr.mxu0 0.0
        %1271 = vmatpush1.msra.mxu0 0.0
        %1272 = vmatprep.subr.mxu0 0.0
        %1273 = vmatpush1.msra.mxu0 0.0
        %1274 = vmatprep.subr.mxu0 0.0
        %1275 = vmatpush1.msra.mxu0 0.0
        %1276 = vmatprep.subr.mxu0 0.0
        %1277 = vmatpush1.msra.mxu0 0.0
        %1278 = vmatprep.mubr.f32.mxu0 0.0
        %1279 = vmatmul.mubr.f32.gmra.mrb[0].mxu0 %v1209
        %v1280 = vpop.f32.mrb[0].mxu0
        %v1281 = vadd.f32 0.0, %v1280
        %v1282 = vpop.f32.mrb[0].mxu0
        %1283 = vmatprep.mubr.f32.mxu0 0.0
        %1284 = vmatmul.mubr.f32.gmra.mrb[0].mxu0 %v1212
        %v1285 = vpop.f32.mrb[0].mxu0
        %v1286 = vadd.f32 0.0, %v1285
        %v1287 = vpop.f32.mrb[0].mxu0
        %1288 = vdwg.mxu0
        %v1290 = vsel %vm549, %v796, 0
        %v1293 = vsel %vm549, %v872, 0
        %1295 = vmatprep.subr.mxu0 0.0
        %1296 = vmatpush1.msra.mxu0 %v875
        %1297 = vmatprep.subr.mxu0 0.0
        %1298 = vmatpush1.msra.mxu0 0.0
        %1299 = vmatprep.subr.mxu0 0.0
        %1300 = vmatpush1.msra.mxu0 0.0
        %1301 = vmatprep.subr.mxu0 0.0
        %1302 = vmatpush1.msra.mxu0 0.0
        %1303 = vmatprep.subr.mxu0 0.0
        %1304 = vmatpush1.msra.mxu0 0.0
        %1305 = vmatprep.subr.mxu0 0.0
        %1306 = vmatpush1.msra.mxu0 0.0
        %1307 = vmatprep.subr.mxu0 0.0
        %1308 = vmatpush1.msra.mxu0 0.0
        %1309 = vmatprep.subr.mxu0 0.0
        %1310 = vmatpush1.msra.mxu0 0.0
        %1311 = vmatprep.subr.mxu0 0.0
        %1312 = vmatpush1.msra.mxu0 0.0
        %1313 = vmatprep.subr.mxu0 0.0
        %1314 = vmatpush1.msra.mxu0 0.0
        %1315 = vmatprep.subr.mxu0 0.0
        %1316 = vmatpush1.msra.mxu0 0.0
        %1317 = vmatprep.subr.mxu0 0.0
        %1318 = vmatpush1.msra.mxu0 0.0
        %1319 = vmatprep.subr.mxu0 0.0
        %1320 = vmatpush1.msra.mxu0 0.0
        %1321 = vmatprep.subr.mxu0 0.0
        %1322 = vmatpush1.msra.mxu0 0.0
        %1323 = vmatprep.subr.mxu0 0.0
        %1324 = vmatpush1.msra.mxu0 0.0
        %1325 = vmatprep.subr.mxu0 0.0
        %1326 = vmatpush1.msra.mxu0 0.0
        %1327 = vmatprep.subr.mxu0 0.0
        %1328 = vmatpush1.msra.mxu0 0.0
        %1329 = vmatprep.subr.mxu0 0.0
        %1330 = vmatpush1.msra.mxu0 0.0
        %1331 = vmatprep.subr.mxu0 0.0
        %1332 = vmatpush1.msra.mxu0 0.0
        %1333 = vmatprep.subr.mxu0 0.0
        %1334 = vmatpush1.msra.mxu0 0.0
        %1335 = vmatprep.subr.mxu0 0.0
        %1336 = vmatpush1.msra.mxu0 0.0
        %1337 = vmatprep.subr.mxu0 0.0
        %1338 = vmatpush1.msra.mxu0 0.0
        %1339 = vmatprep.subr.mxu0 0.0
        %1340 = vmatpush1.msra.mxu0 0.0
        %1341 = vmatprep.subr.mxu0 0.0
        %1342 = vmatpush1.msra.mxu0 0.0
        %1343 = vmatprep.subr.mxu0 0.0
        %1344 = vmatpush1.msra.mxu0 0.0
        %1345 = vmatprep.subr.mxu0 0.0
        %1346 = vmatpush1.msra.mxu0 0.0
        %1347 = vmatprep.subr.mxu0 0.0
        %1348 = vmatpush1.msra.mxu0 0.0
        %1349 = vmatprep.subr.mxu0 0.0
        %1350 = vmatpush1.msra.mxu0 0.0
        %1351 = vmatprep.subr.mxu0 0.0
        %1352 = vmatpush1.msra.mxu0 0.0
        %1353 = vmatprep.subr.mxu0 0.0
        %1354 = vmatpush1.msra.mxu0 0.0
        %1355 = vmatprep.subr.mxu0 0.0
        %1356 = vmatpush1.msra.mxu0 0.0
        %1357 = vmatprep.subr.mxu0 0.0
        %1358 = vmatpush1.msra.mxu0 0.0
        %1359 = vmatprep.mubr.f32.mxu0 0.0
        %1360 = vmatmul.mubr.f32.gmra.mrb[0].mxu0 %v1290
        %v1361 = vpop.f32.mrb[0].mxu0
        %v1362 = vadd.f32 %v1281, %v1361
        %v1363 = vpop.f32.mrb[0].mxu0
        %1364 = vmatprep.mubr.f32.mxu0 0.0
        %1365 = vmatmul.mubr.f32.gmra.mrb[0].mxu0 %v1293
        %v1366 = vpop.f32.mrb[0].mxu0
        %v1367 = vadd.f32 %v1286, %v1366
        %v1368 = vpop.f32.mrb[0].mxu0
        %1369 = vdwg.mxu0
        %1370 = vrot.lane.b32.xlu0 %v538, 112
        %v1371 = vpop.permute.xlu0 %1370
        %1372 = vrot.lane.b32.xlu0 %v538, 80
        %v1373 = vpop.permute.xlu0 %1372
        %v1374 = vsel %vm549, %v1371, 0
        %v1376 = vsel %vm549, %v1373, 0
        %1378 = vmatprep.subr.mxu0 0.0
        %1379 = vmatpush1.xpose.msra.mxu0 %v1376
        %1380 = vmatprep.subr.mxu0 0.0
        %1381 = vmatpush1.xpose.msra.mxu0 0.0
        %1382 = vmatprep.subr.mxu0 0.0
        %1383 = vmatpush1.xpose.msra.mxu0 0.0
        %1384 = vmatprep.subr.mxu0 0.0
        %1385 = vmatpush1.xpose.msra.mxu0 0.0
        %1386 = vmatprep.subr.mxu0 0.0
        %1387 = vmatpush1.xpose.msra.mxu0 0.0
        %1388 = vmatprep.subr.mxu0 0.0
        %1389 = vmatpush1.xpose.msra.mxu0 0.0
        %1390 = vmatprep.subr.mxu0 0.0
        %1391 = vmatpush1.xpose.msra.mxu0 0.0
        %1392 = vmatprep.subr.mxu0 0.0
        %1393 = vmatpush1.xpose.msra.mxu0 0.0
        %1394 = vmatprep.subr.mxu0 0.0
        %1395 = vmatpush1.xpose.msra.mxu0 0.0
        %1396 = vmatprep.subr.mxu0 0.0
        %1397 = vmatpush1.xpose.msra.mxu0 0.0
        %1398 = vmatprep.subr.mxu0 0.0
        %1399 = vmatpush1.xpose.msra.mxu0 0.0
        %1400 = vmatprep.subr.mxu0 0.0
        %1401 = vmatpush1.xpose.msra.mxu0 0.0
        %1402 = vmatprep.subr.mxu0 0.0
        %1403 = vmatpush1.xpose.msra.mxu0 0.0
        %1404 = vmatprep.subr.mxu0 0.0
        %1405 = vmatpush1.xpose.msra.mxu0 0.0
        %1406 = vmatprep.subr.mxu0 0.0
        %1407 = vmatpush1.xpose.msra.mxu0 0.0
        %1408 = vmatprep.subr.mxu0 0.0
        %1409 = vmatpush1.xpose.msra.mxu0 0.0
        %1410 = vmatprep.subr.mxu0 0.0
        %1411 = vmatpush1.xpose.msra.mxu0 0.0
        %1412 = vmatprep.subr.mxu0 0.0
        %1413 = vmatpush1.xpose.msra.mxu0 0.0
        %1414 = vmatprep.subr.mxu0 0.0
        %1415 = vmatpush1.xpose.msra.mxu0 0.0
        %1416 = vmatprep.subr.mxu0 0.0
        %1417 = vmatpush1.xpose.msra.mxu0 0.0
        %1418 = vmatprep.subr.mxu0 0.0
        %1419 = vmatpush1.xpose.msra.mxu0 0.0
        %1420 = vmatprep.subr.mxu0 0.0
        %1421 = vmatpush1.xpose.msra.mxu0 0.0
        %1422 = vmatprep.subr.mxu0 0.0
        %1423 = vmatpush1.xpose.msra.mxu0 0.0
        %1424 = vmatprep.subr.mxu0 0.0
        %1425 = vmatpush1.xpose.msra.mxu0 0.0
        %1426 = vmatprep.subr.mxu0 0.0
        %1427 = vmatpush1.xpose.msra.mxu0 0.0
        %1428 = vmatprep.subr.mxu0 0.0
        %1429 = vmatpush1.xpose.msra.mxu0 0.0
        %1430 = vmatprep.subr.mxu0 0.0
        %1431 = vmatpush1.xpose.msra.mxu0 0.0
        %1432 = vmatprep.subr.mxu0 0.0
        %1433 = vmatpush1.xpose.msra.mxu0 0.0
        %1434 = vmatprep.subr.mxu0 0.0
        %1435 = vmatpush1.xpose.msra.mxu0 0.0
        %1436 = vmatprep.subr.mxu0 0.0
        %1437 = vmatpush1.xpose.msra.mxu0 0.0
        %1438 = vmatprep.subr.mxu0 0.0
        %1439 = vmatpush1.xpose.msra.mxu0 0.0
        %1440 = vmatprep.subr.mxu0 0.0
        %1441 = vmatpush1.xpose.msra.mxu0 0.0
        %1442 = vmatprep.mubr.f32.mxu0 0.0
        %1443 = vmatmul.mubr.f32.gmra.mrb[0].mxu0 %v1374
        %v1444 = vpop.f32.mrb[0].mxu0
        %v1445 = vadd.f32 0.0, %v1444
        %v1446 = vpop.f32.mrb[0].mxu0
        %1447 = vdwg.mxu0
        %1448 = vrot.lane.b32.xlu0 %v543, 112
        %v1449 = vpop.permute.xlu0 %1448
        %1450 = vrot.lane.b32.xlu0 %v543, 80
        %v1451 = vpop.permute.xlu0 %1450
        %v1452 = vsel %vm549, %v1449, 0
        %v1454 = vsel %vm549, %v1451, 0
        %1456 = vmatprep.subr.mxu0 0.0
        %1457 = vmatpush1.xpose.msra.mxu0 %v1454
        %1458 = vmatprep.subr.mxu0 0.0
        %1459 = vmatpush1.xpose.msra.mxu0 0.0
        %1460 = vmatprep.subr.mxu0 0.0
        %1461 = vmatpush1.xpose.msra.mxu0 0.0
        %1462 = vmatprep.subr.mxu0 0.0
        %1463 = vmatpush1.xpose.msra.mxu0 0.0
        %1464 = vmatprep.subr.mxu0 0.0
        %1465 = vmatpush1.xpose.msra.mxu0 0.0
        %1466 = vmatprep.subr.mxu0 0.0
        %1467 = vmatpush1.xpose.msra.mxu0 0.0
        %1468 = vmatprep.subr.mxu0 0.0
        %1469 = vmatpush1.xpose.msra.mxu0 0.0
        %1470 = vmatprep.subr.mxu0 0.0
        %1471 = vmatpush1.xpose.msra.mxu0 0.0
        %1472 = vmatprep.subr.mxu0 0.0
        %1473 = vmatpush1.xpose.msra.mxu0 0.0
        %1474 = vmatprep.subr.mxu0 0.0
        %1475 = vmatpush1.xpose.msra.mxu0 0.0
        %1476 = vmatprep.subr.mxu0 0.0
        %1477 = vmatpush1.xpose.msra.mxu0 0.0
        %1478 = vmatprep.subr.mxu0 0.0
        %1479 = vmatpush1.xpose.msra.mxu0 0.0
        %1480 = vmatprep.subr.mxu0 0.0
        %1481 = vmatpush1.xpose.msra.mxu0 0.0
        %1482 = vmatprep.subr.mxu0 0.0
        %1483 = vmatpush1.xpose.msra.mxu0 0.0
        %1484 = vmatprep.subr.mxu0 0.0
        %1485 = vmatpush1.xpose.msra.mxu0 0.0
        %1486 = vmatprep.subr.mxu0 0.0
        %1487 = vmatpush1.xpose.msra.mxu0 0.0
        %1488 = vmatprep.subr.mxu0 0.0
        %1489 = vmatpush1.xpose.msra.mxu0 0.0
        %1490 = vmatprep.subr.mxu0 0.0
        %1491 = vmatpush1.xpose.msra.mxu0 0.0
        %1492 = vmatprep.subr.mxu0 0.0
        %1493 = vmatpush1.xpose.msra.mxu0 0.0
        %1494 = vmatprep.subr.mxu0 0.0
        %1495 = vmatpush1.xpose.msra.mxu0 0.0
        %1496 = vmatprep.subr.mxu0 0.0
        %1497 = vmatpush1.xpose.msra.mxu0 0.0
        %1498 = vmatprep.subr.mxu0 0.0
        %1499 = vmatpush1.xpose.msra.mxu0 0.0
        %1500 = vmatprep.subr.mxu0 0.0
        %1501 = vmatpush1.xpose.msra.mxu0 0.0
        %1502 = vmatprep.subr.mxu0 0.0
        %1503 = vmatpush1.xpose.msra.mxu0 0.0
        %1504 = vmatprep.subr.mxu0 0.0
        %1505 = vmatpush1.xpose.msra.mxu0 0.0
        %1506 = vmatprep.subr.mxu0 0.0
        %1507 = vmatpush1.xpose.msra.mxu0 0.0
        %1508 = vmatprep.subr.mxu0 0.0
        %1509 = vmatpush1.xpose.msra.mxu0 0.0
        %1510 = vmatprep.subr.mxu0 0.0
        %1511 = vmatpush1.xpose.msra.mxu0 0.0
        %1512 = vmatprep.subr.mxu0 0.0
        %1513 = vmatpush1.xpose.msra.mxu0 0.0
        %1514 = vmatprep.subr.mxu0 0.0
        %1515 = vmatpush1.xpose.msra.mxu0 0.0
        %1516 = vmatprep.subr.mxu0 0.0
        %1517 = vmatpush1.xpose.msra.mxu0 0.0
        %1518 = vmatprep.subr.mxu0 0.0
        %1519 = vmatpush1.xpose.msra.mxu0 0.0
        %1520 = vmatprep.mubr.f32.mxu0 0.0
        %1521 = vmatmul.mubr.f32.gmra.mrb[0].mxu0 %v1452
        %v1522 = vpop.f32.mrb[0].mxu0
        %v1523 = vadd.f32 0.0, %v1522
        %v1524 = vpop.f32.mrb[0].mxu0
        %1525 = vdwg.mxu0
        %v1526 = vsel %vm549, %v1445, -inf
        %1527 = vmax.xlane.f32.xlu0 %v1526
        %v1528 = vpop.xlane.xlu0 %1527
        %v1529 = vsel %vm549, %v1523, -inf
        %1530 = vmax.xlane.f32.xlu0 %v1529
        %v1531 = vpop.xlane.xlu0 %1530
        %v1532 = vsub.f32 %v1445, %v1528
        %v1533 = vsub.f32 %v1523, %v1531
        %v1534 = vmul.f32 %v1532, 1.442695
        %v1535 = vpow.pop %v1534
        %v1536 = vmul.f32 %v1533, 1.442695
        %v1537 = vpow.pop %v1536
        %v1538 = vsel %vm549, %v1535, 0.0
        %1539 = vadd.xlane.f32.xlu0 %v1538
        %v1540 = vpop.xlane.xlu0 %1539
        %v1541 = vsel %vm549, %v1537, 0.0
        %1542 = vadd.xlane.f32.xlu0 %v1541
        %v1543 = vpop.xlane.xlu0 %1542
        %v1544 = vrcp.pop %v1540
        %v1545 = vrcp.pop %v1543
        %v1546 = vmul.f32 %v1535, %v1544
        %v1547 = vmul.f32 %v1537, %v1545
        %1548 = vrot.lane.b32.xlu0 %v538, 48
        %v1549 = vpop.permute.xlu0 %1548
        %v1552 = vsel %vm549, %v1546, 0
        %1554 = vmatprep.subr.mxu0 0.0
        %1555 = vmatpush1.msra.mxu0 %v1549
        %1556 = vmatprep.subr.mxu0 0.0
        %1557 = vmatpush1.msra.mxu0 0.0
        %1558 = vmatprep.subr.mxu0 0.0
        %1559 = vmatpush1.msra.mxu0 0.0
        %1560 = vmatprep.subr.mxu0 0.0
        %1561 = vmatpush1.msra.mxu0 0.0
        %1562 = vmatprep.subr.mxu0 0.0
        %1563 = vmatpush1.msra.mxu0 0.0
        %1564 = vmatprep.subr.mxu0 0.0
        %1565 = vmatpush1.msra.mxu0 0.0
        %1566 = vmatprep.subr.mxu0 0.0
        %1567 = vmatpush1.msra.mxu0 0.0
        %1568 = vmatprep.subr.mxu0 0.0
        %1569 = vmatpush1.msra.mxu0 0.0
        %1570 = vmatprep.subr.mxu0 0.0
        %1571 = vmatpush1.msra.mxu0 0.0
        %1572 = vmatprep.subr.mxu0 0.0
        %1573 = vmatpush1.msra.mxu0 0.0
        %1574 = vmatprep.subr.mxu0 0.0
        %1575 = vmatpush1.msra.mxu0 0.0
        %1576 = vmatprep.subr.mxu0 0.0
        %1577 = vmatpush1.msra.mxu0 0.0
        %1578 = vmatprep.subr.mxu0 0.0
        %1579 = vmatpush1.msra.mxu0 0.0
        %1580 = vmatprep.subr.mxu0 0.0
        %1581 = vmatpush1.msra.mxu0 0.0
        %1582 = vmatprep.subr.mxu0 0.0
        %1583 = vmatpush1.msra.mxu0 0.0
        %1584 = vmatprep.subr.mxu0 0.0
        %1585 = vmatpush1.msra.mxu0 0.0
        %1586 = vmatprep.subr.mxu0 0.0
        %1587 = vmatpush1.msra.mxu0 0.0
        %1588 = vmatprep.subr.mxu0 0.0
        %1589 = vmatpush1.msra.mxu0 0.0
        %1590 = vmatprep.subr.mxu0 0.0
        %1591 = vmatpush1.msra.mxu0 0.0
        %1592 = vmatprep.subr.mxu0 0.0
        %1593 = vmatpush1.msra.mxu0 0.0
        %1594 = vmatprep.subr.mxu0 0.0
        %1595 = vmatpush1.msra.mxu0 0.0
        %1596 = vmatprep.subr.mxu0 0.0
        %1597 = vmatpush1.msra.mxu0 0.0
        %1598 = vmatprep.subr.mxu0 0.0
        %1599 = vmatpush1.msra.mxu0 0.0
        %1600 = vmatprep.subr.mxu0 0.0
        %1601 = vmatpush1.msra.mxu0 0.0
        %1602 = vmatprep.subr.mxu0 0.0
        %1603 = vmatpush1.msra.mxu0 0.0
        %1604 = vmatprep.subr.mxu0 0.0
        %1605 = vmatpush1.msra.mxu0 0.0
        %1606 = vmatprep.subr.mxu0 0.0
        %1607 = vmatpush1.msra.mxu0 0.0
        %1608 = vmatprep.subr.mxu0 0.0
        %1609 = vmatpush1.msra.mxu0 0.0
        %1610 = vmatprep.subr.mxu0 0.0
        %1611 = vmatpush1.msra.mxu0 0.0
        %1612 = vmatprep.subr.mxu0 0.0
        %1613 = vmatpush1.msra.mxu0 0.0
        %1614 = vmatprep.subr.mxu0 0.0
        %1615 = vmatpush1.msra.mxu0 0.0
        %1616 = vmatprep.subr.mxu0 0.0
        %1617 = vmatpush1.msra.mxu0 0.0
        %1618 = vmatprep.mubr.f32.mxu0 0.0
        %1619 = vmatmul.mubr.f32.gmra.mrb[0].mxu0 %v1552
        %v1620 = vpop.f32.mrb[0].mxu0
        %v1621 = vadd.f32 0.0, %v1620
        %v1622 = vpop.f32.mrb[0].mxu0
        %1623 = vdwg.mxu0
        %1624 = vrot.lane.b32.xlu0 %v543, 48
        %v1625 = vpop.permute.xlu0 %1624
        %v1628 = vsel %vm549, %v1547, 0
        %1630 = vmatprep.subr.mxu0 0.0
        %1631 = vmatpush1.msra.mxu0 %v1625
        %1632 = vmatprep.subr.mxu0 0.0
        %1633 = vmatpush1.msra.mxu0 0.0
        %1634 = vmatprep.subr.mxu0 0.0
        %1635 = vmatpush1.msra.mxu0 0.0
        %1636 = vmatprep.subr.mxu0 0.0
        %1637 = vmatpush1.msra.mxu0 0.0
        %1638 = vmatprep.subr.mxu0 0.0
        %1639 = vmatpush1.msra.mxu0 0.0
        %1640 = vmatprep.subr.mxu0 0.0
        %1641 = vmatpush1.msra.mxu0 0.0
        %1642 = vmatprep.subr.mxu0 0.0
        %1643 = vmatpush1.msra.mxu0 0.0
        %1644 = vmatprep.subr.mxu0 0.0
        %1645 = vmatpush1.msra.mxu0 0.0
        %1646 = vmatprep.subr.mxu0 0.0
        %1647 = vmatpush1.msra.mxu0 0.0
        %1648 = vmatprep.subr.mxu0 0.0
        %1649 = vmatpush1.msra.mxu0 0.0
        %1650 = vmatprep.subr.mxu0 0.0
        %1651 = vmatpush1.msra.mxu0 0.0
        %1652 = vmatprep.subr.mxu0 0.0
        %1653 = vmatpush1.msra.mxu0 0.0
        %1654 = vmatprep.subr.mxu0 0.0
        %1655 = vmatpush1.msra.mxu0 0.0
        %1656 = vmatprep.subr.mxu0 0.0
        %1657 = vmatpush1.msra.mxu0 0.0
        %1658 = vmatprep.subr.mxu0 0.0
        %1659 = vmatpush1.msra.mxu0 0.0
        %1660 = vmatprep.subr.mxu0 0.0
        %1661 = vmatpush1.msra.mxu0 0.0
        %1662 = vmatprep.subr.mxu0 0.0
        %1663 = vmatpush1.msra.mxu0 0.0
        %1664 = vmatprep.subr.mxu0 0.0
        %1665 = vmatpush1.msra.mxu0 0.0
        %1666 = vmatprep.subr.mxu0 0.0
        %1667 = vmatpush1.msra.mxu0 0.0
        %1668 = vmatprep.subr.mxu0 0.0
        %1669 = vmatpush1.msra.mxu0 0.0
        %1670 = vmatprep.subr.mxu0 0.0
        %1671 = vmatpush1.msra.mxu0 0.0
        %1672 = vmatprep.subr.mxu0 0.0
        %1673 = vmatpush1.msra.mxu0 0.0
        %1674 = vmatprep.subr.mxu0 0.0
        %1675 = vmatpush1.msra.mxu0 0.0
        %1676 = vmatprep.subr.mxu0 0.0
        %1677 = vmatpush1.msra.mxu0 0.0
        %1678 = vmatprep.subr.mxu0 0.0
        %1679 = vmatpush1.msra.mxu0 0.0
        %1680 = vmatprep.subr.mxu0 0.0
        %1681 = vmatpush1.msra.mxu0 0.0
        %1682 = vmatprep.subr.mxu0 0.0
        %1683 = vmatpush1.msra.mxu0 0.0
        %1684 = vmatprep.subr.mxu0 0.0
        %1685 = vmatpush1.msra.mxu0 0.0
        %1686 = vmatprep.subr.mxu0 0.0
        %1687 = vmatpush1.msra.mxu0 0.0
        %1688 = vmatprep.subr.mxu0 0.0
        %1689 = vmatpush1.msra.mxu0 0.0
        %1690 = vmatprep.subr.mxu0 0.0
        %1691 = vmatpush1.msra.mxu0 0.0
        %1692 = vmatprep.subr.mxu0 0.0
        %1693 = vmatpush1.msra.mxu0 0.0
        %1694 = vmatprep.mubr.f32.mxu0 0.0
        %1695 = vmatmul.mubr.f32.gmra.mrb[0].mxu0 %v1628
        %v1696 = vpop.f32.mrb[0].mxu0
        %v1697 = vadd.f32 0.0, %v1696
        %v1698 = vpop.f32.mrb[0].mxu0
        %1699 = vdwg.mxu0
        %s1700 = scalar_lea.vmem %s422, 16
        %v1701 = vld [vmem:[%s1700] sm:$0xff]
        %v1703 = vsel %vm549, %v1621, 0
        %v1706 = vsel %vm549, %v1697, 0
        %1708 = vmatprep.subr.mxu0 0.0
        %1709 = vmatpush1.msra.mxu0 %v1701
        %1710 = vmatprep.subr.mxu0 0.0
        %1711 = vmatpush1.msra.mxu0 0.0
        %1712 = vmatprep.subr.mxu0 0.0
        %1713 = vmatpush1.msra.mxu0 0.0
        %1714 = vmatprep.subr.mxu0 0.0
        %1715 = vmatpush1.msra.mxu0 0.0
        %1716 = vmatprep.subr.mxu0 0.0
        %1717 = vmatpush1.msra.mxu0 0.0
        %1718 = vmatprep.subr.mxu0 0.0
        %1719 = vmatpush1.msra.mxu0 0.0
        %1720 = vmatprep.subr.mxu0 0.0
        %1721 = vmatpush1.msra.mxu0 0.0
        %1722 = vmatprep.subr.mxu0 0.0
        %1723 = vmatpush1.msra.mxu0 0.0
        %1724 = vmatprep.subr.mxu0 0.0
        %1725 = vmatpush1.msra.mxu0 0.0
        %1726 = vmatprep.subr.mxu0 0.0
        %1727 = vmatpush1.msra.mxu0 0.0
        %1728 = vmatprep.subr.mxu0 0.0
        %1729 = vmatpush1.msra.mxu0 0.0
        %1730 = vmatprep.subr.mxu0 0.0
        %1731 = vmatpush1.msra.mxu0 0.0
        %1732 = vmatprep.subr.mxu0 0.0
        %1733 = vmatpush1.msra.mxu0 0.0
        %1734 = vmatprep.subr.mxu0 0.0
        %1735 = vmatpush1.msra.mxu0 0.0
        %1736 = vmatprep.subr.mxu0 0.0
        %1737 = vmatpush1.msra.mxu0 0.0
        %1738 = vmatprep.subr.mxu0 0.0
        %1739 = vmatpush1.msra.mxu0 0.0
        %1740 = vmatprep.subr.mxu0 0.0
        %1741 = vmatpush1.msra.mxu0 0.0
        %1742 = vmatprep.subr.mxu0 0.0
        %1743 = vmatpush1.msra.mxu0 0.0
        %1744 = vmatprep.subr.mxu0 0.0
        %1745 = vmatpush1.msra.mxu0 0.0
        %1746 = vmatprep.subr.mxu0 0.0
        %1747 = vmatpush1.msra.mxu0 0.0
        %1748 = vmatprep.subr.mxu0 0.0
        %1749 = vmatpush1.msra.mxu0 0.0
        %1750 = vmatprep.subr.mxu0 0.0
        %1751 = vmatpush1.msra.mxu0 0.0
        %1752 = vmatprep.subr.mxu0 0.0
        %1753 = vmatpush1.msra.mxu0 0.0
        %1754 = vmatprep.subr.mxu0 0.0
        %1755 = vmatpush1.msra.mxu0 0.0
        %1756 = vmatprep.subr.mxu0 0.0
        %1757 = vmatpush1.msra.mxu0 0.0
        %1758 = vmatprep.subr.mxu0 0.0
        %1759 = vmatpush1.msra.mxu0 0.0
        %1760 = vmatprep.subr.mxu0 0.0
        %1761 = vmatpush1.msra.mxu0 0.0
        %1762 = vmatprep.subr.mxu0 0.0
        %1763 = vmatpush1.msra.mxu0 0.0
        %1764 = vmatprep.subr.mxu0 0.0
        %1765 = vmatpush1.msra.mxu0 0.0
        %1766 = vmatprep.subr.mxu0 0.0
        %1767 = vmatpush1.msra.mxu0 0.0
        %1768 = vmatprep.subr.mxu0 0.0
        %1769 = vmatpush1.msra.mxu0 0.0
        %1770 = vmatprep.subr.mxu0 0.0
        %1771 = vmatpush1.msra.mxu0 0.0
        %1772 = vmatprep.mubr.f32.mxu0 0.0
        %1773 = vmatmul.mubr.f32.gmra.mrb[0].mxu0 %v1703
        %v1774 = vpop.f32.mrb[0].mxu0
        %v1775 = vadd.f32 0.0, %v1774
        %v1776 = vpop.f32.mrb[0].mxu0
        %1777 = vmatprep.mubr.f32.mxu0 0.0
        %1778 = vmatmul.mubr.f32.gmra.mrb[0].mxu0 %v1706
        %v1779 = vpop.f32.mrb[0].mxu0
        %v1780 = vadd.f32 0.0, %v1779
        %v1781 = vpop.f32.mrb[0].mxu0
        %1782 = vdwg.mxu0
        %v1783 = vadd.f32 %v1362, %v1775
        %v1784 = vadd.f32 %v1367, %v1780
        %1785 = vrot.lane.b32.xlu0 %v538, 104
        %v1786 = vpop.permute.xlu0 %1785
        %1787 = vrot.lane.b32.xlu0 %v538, 72
        %v1788 = vpop.permute.xlu0 %1787
        %v1789 = vsel %vm549, %v1786, 0
        %v1791 = vsel %vm549, %v1788, 0
        %1793 = vmatprep.subr.mxu0 0.0
        %1794 = vmatpush1.xpose.msra.mxu0 %v1791
        %1795 = vmatprep.subr.mxu0 0.0
        %1796 = vmatpush1.xpose.msra.mxu0 0.0
        %1797 = vmatprep.subr.mxu0 0.0
        %1798 = vmatpush1.xpose.msra.mxu0 0.0
        %1799 = vmatprep.subr.mxu0 0.0
        %1800 = vmatpush1.xpose.msra.mxu0 0.0
        %1801 = vmatprep.subr.mxu0 0.0
        %1802 = vmatpush1.xpose.msra.mxu0 0.0
        %1803 = vmatprep.subr.mxu0 0.0
        %1804 = vmatpush1.xpose.msra.mxu0 0.0
        %1805 = vmatprep.subr.mxu0 0.0
        %1806 = vmatpush1.xpose.msra.mxu0 0.0
        %1807 = vmatprep.subr.mxu0 0.0
        %1808 = vmatpush1.xpose.msra.mxu0 0.0
        %1809 = vmatprep.subr.mxu0 0.0
        %1810 = vmatpush1.xpose.msra.mxu0 0.0
        %1811 = vmatprep.subr.mxu0 0.0
        %1812 = vmatpush1.xpose.msra.mxu0 0.0
        %1813 = vmatprep.subr.mxu0 0.0
        %1814 = vmatpush1.xpose.msra.mxu0 0.0
        %1815 = vmatprep.subr.mxu0 0.0
        %1816 = vmatpush1.xpose.msra.mxu0 0.0
        %1817 = vmatprep.subr.mxu0 0.0
        %1818 = vmatpush1.xpose.msra.mxu0 0.0
        %1819 = vmatprep.subr.mxu0 0.0
        %1820 = vmatpush1.xpose.msra.mxu0 0.0
        %1821 = vmatprep.subr.mxu0 0.0
        %1822 = vmatpush1.xpose.msra.mxu0 0.0
        %1823 = vmatprep.subr.mxu0 0.0
        %1824 = vmatpush1.xpose.msra.mxu0 0.0
        %1825 = vmatprep.subr.mxu0 0.0
        %1826 = vmatpush1.xpose.msra.mxu0 0.0
        %1827 = vmatprep.subr.mxu0 0.0
        %1828 = vmatpush1.xpose.msra.mxu0 0.0
        %1829 = vmatprep.subr.mxu0 0.0
        %1830 = vmatpush1.xpose.msra.mxu0 0.0
        %1831 = vmatprep.subr.mxu0 0.0
        %1832 = vmatpush1.xpose.msra.mxu0 0.0
        %1833 = vmatprep.subr.mxu0 0.0
        %1834 = vmatpush1.xpose.msra.mxu0 0.0
        %1835 = vmatprep.subr.mxu0 0.0
        %1836 = vmatpush1.xpose.msra.mxu0 0.0
        %1837 = vmatprep.subr.mxu0 0.0
        %1838 = vmatpush1.xpose.msra.mxu0 0.0
        %1839 = vmatprep.subr.mxu0 0.0
        %1840 = vmatpush1.xpose.msra.mxu0 0.0
        %1841 = vmatprep.subr.mxu0 0.0
        %1842 = vmatpush1.xpose.msra.mxu0 0.0
        %1843 = vmatprep.subr.mxu0 0.0
        %1844 = vmatpush1.xpose.msra.mxu0 0.0
        %1845 = vmatprep.subr.mxu0 0.0
        %1846 = vmatpush1.xpose.msra.mxu0 0.0
        %1847 = vmatprep.subr.mxu0 0.0
        %1848 = vmatpush1.xpose.msra.mxu0 0.0
        %1849 = vmatprep.subr.mxu0 0.0
        %1850 = vmatpush1.xpose.msra.mxu0 0.0
        %1851 = vmatprep.subr.mxu0 0.0
        %1852 = vmatpush1.xpose.msra.mxu0 0.0
        %1853 = vmatprep.subr.mxu0 0.0
        %1854 = vmatpush1.xpose.msra.mxu0 0.0
        %1855 = vmatprep.subr.mxu0 0.0
        %1856 = vmatpush1.xpose.msra.mxu0 0.0
        %1857 = vmatprep.mubr.f32.mxu0 0.0
        %1858 = vmatmul.mubr.f32.gmra.mrb[0].mxu0 %v1789
        %v1859 = vpop.f32.mrb[0].mxu0
        %v1860 = vadd.f32 0.0, %v1859
        %v1861 = vpop.f32.mrb[0].mxu0
        %1862 = vdwg.mxu0
        %1863 = vrot.lane.b32.xlu0 %v543, 104
        %v1864 = vpop.permute.xlu0 %1863
        %1865 = vrot.lane.b32.xlu0 %v543, 72
        %v1866 = vpop.permute.xlu0 %1865
        %v1867 = vsel %vm549, %v1864, 0
        %v1869 = vsel %vm549, %v1866, 0
        %1871 = vmatprep.subr.mxu0 0.0
        %1872 = vmatpush1.xpose.msra.mxu0 %v1869
        %1873 = vmatprep.subr.mxu0 0.0
        %1874 = vmatpush1.xpose.msra.mxu0 0.0
        %1875 = vmatprep.subr.mxu0 0.0
        %1876 = vmatpush1.xpose.msra.mxu0 0.0
        %1877 = vmatprep.subr.mxu0 0.0
        %1878 = vmatpush1.xpose.msra.mxu0 0.0
        %1879 = vmatprep.subr.mxu0 0.0
        %1880 = vmatpush1.xpose.msra.mxu0 0.0
        %1881 = vmatprep.subr.mxu0 0.0
        %1882 = vmatpush1.xpose.msra.mxu0 0.0
        %1883 = vmatprep.subr.mxu0 0.0
        %1884 = vmatpush1.xpose.msra.mxu0 0.0
        %1885 = vmatprep.subr.mxu0 0.0
        %1886 = vmatpush1.xpose.msra.mxu0 0.0
        %1887 = vmatprep.subr.mxu0 0.0
        %1888 = vmatpush1.xpose.msra.mxu0 0.0
        %1889 = vmatprep.subr.mxu0 0.0
        %1890 = vmatpush1.xpose.msra.mxu0 0.0
        %1891 = vmatprep.subr.mxu0 0.0
        %1892 = vmatpush1.xpose.msra.mxu0 0.0
        %1893 = vmatprep.subr.mxu0 0.0
        %1894 = vmatpush1.xpose.msra.mxu0 0.0
        %1895 = vmatprep.subr.mxu0 0.0
        %1896 = vmatpush1.xpose.msra.mxu0 0.0
        %1897 = vmatprep.subr.mxu0 0.0
        %1898 = vmatpush1.xpose.msra.mxu0 0.0
        %1899 = vmatprep.subr.mxu0 0.0
        %1900 = vmatpush1.xpose.msra.mxu0 0.0
        %1901 = vmatprep.subr.mxu0 0.0
        %1902 = vmatpush1.xpose.msra.mxu0 0.0
        %1903 = vmatprep.subr.mxu0 0.0
        %1904 = vmatpush1.xpose.msra.mxu0 0.0
        %1905 = vmatprep.subr.mxu0 0.0
        %1906 = vmatpush1.xpose.msra.mxu0 0.0
        %1907 = vmatprep.subr.mxu0 0.0
        %1908 = vmatpush1.xpose.msra.mxu0 0.0
        %1909 = vmatprep.subr.mxu0 0.0
        %1910 = vmatpush1.xpose.msra.mxu0 0.0
        %1911 = vmatprep.subr.mxu0 0.0
        %1912 = vmatpush1.xpose.msra.mxu0 0.0
        %1913 = vmatprep.subr.mxu0 0.0
        %1914 = vmatpush1.xpose.msra.mxu0 0.0
        %1915 = vmatprep.subr.mxu0 0.0
        %1916 = vmatpush1.xpose.msra.mxu0 0.0
        %1917 = vmatprep.subr.mxu0 0.0
        %1918 = vmatpush1.xpose.msra.mxu0 0.0
        %1919 = vmatprep.subr.mxu0 0.0
        %1920 = vmatpush1.xpose.msra.mxu0 0.0
        %1921 = vmatprep.subr.mxu0 0.0
        %1922 = vmatpush1.xpose.msra.mxu0 0.0
        %1923 = vmatprep.subr.mxu0 0.0
        %1924 = vmatpush1.xpose.msra.mxu0 0.0
        %1925 = vmatprep.subr.mxu0 0.0
        %1926 = vmatpush1.xpose.msra.mxu0 0.0
        %1927 = vmatprep.subr.mxu0 0.0
        %1928 = vmatpush1.xpose.msra.mxu0 0.0
        %1929 = vmatprep.subr.mxu0 0.0
        %1930 = vmatpush1.xpose.msra.mxu0 0.0
        %1931 = vmatprep.subr.mxu0 0.0
        %1932 = vmatpush1.xpose.msra.mxu0 0.0
        %1933 = vmatprep.subr.mxu0 0.0
        %1934 = vmatpush1.xpose.msra.mxu0 0.0
        %1935 = vmatprep.mubr.f32.mxu0 0.0
        %1936 = vmatmul.mubr.f32.gmra.mrb[0].mxu0 %v1867
        %v1937 = vpop.f32.mrb[0].mxu0
        %v1938 = vadd.f32 0.0, %v1937
        %v1939 = vpop.f32.mrb[0].mxu0
        %1940 = vdwg.mxu0
        %v1941 = vsel %vm549, %v1860, -inf
        %1942 = vmax.xlane.f32.xlu0 %v1941
        %v1943 = vpop.xlane.xlu0 %1942
        %v1944 = vsel %vm549, %v1938, -inf
        %1945 = vmax.xlane.f32.xlu0 %v1944
        %v1946 = vpop.xlane.xlu0 %1945
        %v1947 = vsub.f32 %v1860, %v1943
        %v1948 = vsub.f32 %v1938, %v1946
        %v1949 = vmul.f32 %v1947, 1.442695
        %v1950 = vpow.pop %v1949
        %v1951 = vmul.f32 %v1948, 1.442695
        %v1952 = vpow.pop %v1951
        %v1953 = vsel %vm549, %v1950, 0.0
        %1954 = vadd.xlane.f32.xlu0 %v1953
        %v1955 = vpop.xlane.xlu0 %1954
        %v1956 = vsel %vm549, %v1952, 0.0
        %1957 = vadd.xlane.f32.xlu0 %v1956
        %v1958 = vpop.xlane.xlu0 %1957
        %v1959 = vrcp.pop %v1955
        %v1960 = vrcp.pop %v1958
        %v1961 = vmul.f32 %v1950, %v1959
        %v1962 = vmul.f32 %v1952, %v1960
        %1963 = vrot.lane.b32.xlu0 %v538, 40
        %v1964 = vpop.permute.xlu0 %1963
        %v1967 = vsel %vm549, %v1961, 0
        %1969 = vmatprep.subr.mxu0 0.0
        %1970 = vmatpush1.msra.mxu0 %v1964
        %1971 = vmatprep.subr.mxu0 0.0
        %1972 = vmatpush1.msra.mxu0 0.0
        %1973 = vmatprep.subr.mxu0 0.0
        %1974 = vmatpush1.msra.mxu0 0.0
        %1975 = vmatprep.subr.mxu0 0.0
        %1976 = vmatpush1.msra.mxu0 0.0
        %1977 = vmatprep.subr.mxu0 0.0
        %1978 = vmatpush1.msra.mxu0 0.0
        %1979 = vmatprep.subr.mxu0 0.0
        %1980 = vmatpush1.msra.mxu0 0.0
        %1981 = vmatprep.subr.mxu0 0.0
        %1982 = vmatpush1.msra.mxu0 0.0
        %1983 = vmatprep.subr.mxu0 0.0
        %1984 = vmatpush1.msra.mxu0 0.0
        %1985 = vmatprep.subr.mxu0 0.0
        %1986 = vmatpush1.msra.mxu0 0.0
        %1987 = vmatprep.subr.mxu0 0.0
        %1988 = vmatpush1.msra.mxu0 0.0
        %1989 = vmatprep.subr.mxu0 0.0
        %1990 = vmatpush1.msra.mxu0 0.0
        %1991 = vmatprep.subr.mxu0 0.0
        %1992 = vmatpush1.msra.mxu0 0.0
        %1993 = vmatprep.subr.mxu0 0.0
        %1994 = vmatpush1.msra.mxu0 0.0
        %1995 = vmatprep.subr.mxu0 0.0
        %1996 = vmatpush1.msra.mxu0 0.0
        %1997 = vmatprep.subr.mxu0 0.0
        %1998 = vmatpush1.msra.mxu0 0.0
        %1999 = vmatprep.subr.mxu0 0.0
        %2000 = vmatpush1.msra.mxu0 0.0
        %2001 = vmatprep.subr.mxu0 0.0
        %2002 = vmatpush1.msra.mxu0 0.0
        %2003 = vmatprep.subr.mxu0 0.0
        %2004 = vmatpush1.msra.mxu0 0.0
        %2005 = vmatprep.subr.mxu0 0.0
        %2006 = vmatpush1.msra.mxu0 0.0
        %2007 = vmatprep.subr.mxu0 0.0
        %2008 = vmatpush1.msra.mxu0 0.0
        %2009 = vmatprep.subr.mxu0 0.0
        %2010 = vmatpush1.msra.mxu0 0.0
        %2011 = vmatprep.subr.mxu0 0.0
        %2012 = vmatpush1.msra.mxu0 0.0
        %2013 = vmatprep.subr.mxu0 0.0
        %2014 = vmatpush1.msra.mxu0 0.0
        %2015 = vmatprep.subr.mxu0 0.0
        %2016 = vmatpush1.msra.mxu0 0.0
        %2017 = vmatprep.subr.mxu0 0.0
        %2018 = vmatpush1.msra.mxu0 0.0
        %2019 = vmatprep.subr.mxu0 0.0
        %2020 = vmatpush1.msra.mxu0 0.0
        %2021 = vmatprep.subr.mxu0 0.0
        %2022 = vmatpush1.msra.mxu0 0.0
        %2023 = vmatprep.subr.mxu0 0.0
        %2024 = vmatpush1.msra.mxu0 0.0
        %2025 = vmatprep.subr.mxu0 0.0
        %2026 = vmatpush1.msra.mxu0 0.0
        %2027 = vmatprep.subr.mxu0 0.0
        %2028 = vmatpush1.msra.mxu0 0.0
        %2029 = vmatprep.subr.mxu0 0.0
        %2030 = vmatpush1.msra.mxu0 0.0
        %2031 = vmatprep.subr.mxu0 0.0
        %2032 = vmatpush1.msra.mxu0 0.0
        %2033 = vmatprep.mubr.f32.mxu0 0.0
        %2034 = vmatmul.mubr.f32.gmra.mrb[0].mxu0 %v1967
        %v2035 = vpop.f32.mrb[0].mxu0
        %v2036 = vadd.f32 0.0, %v2035
        %v2037 = vpop.f32.mrb[0].mxu0
        %2038 = vdwg.mxu0
        %2039 = vrot.lane.b32.xlu0 %v543, 40
        %v2040 = vpop.permute.xlu0 %2039
        %v2043 = vsel %vm549, %v1962, 0
        %2045 = vmatprep.subr.mxu0 0.0
        %2046 = vmatpush1.msra.mxu0 %v2040
        %2047 = vmatprep.subr.mxu0 0.0
        %2048 = vmatpush1.msra.mxu0 0.0
        %2049 = vmatprep.subr.mxu0 0.0
        %2050 = vmatpush1.msra.mxu0 0.0
        %2051 = vmatprep.subr.mxu0 0.0
        %2052 = vmatpush1.msra.mxu0 0.0
        %2053 = vmatprep.subr.mxu0 0.0
        %2054 = vmatpush1.msra.mxu0 0.0
        %2055 = vmatprep.subr.mxu0 0.0
        %2056 = vmatpush1.msra.mxu0 0.0
        %2057 = vmatprep.subr.mxu0 0.0
        %2058 = vmatpush1.msra.mxu0 0.0
        %2059 = vmatprep.subr.mxu0 0.0
        %2060 = vmatpush1.msra.mxu0 0.0
        %2061 = vmatprep.subr.mxu0 0.0
        %2062 = vmatpush1.msra.mxu0 0.0
        %2063 = vmatprep.subr.mxu0 0.0
        %2064 = vmatpush1.msra.mxu0 0.0
        %2065 = vmatprep.subr.mxu0 0.0
        %2066 = vmatpush1.msra.mxu0 0.0
        %2067 = vmatprep.subr.mxu0 0.0
        %2068 = vmatpush1.msra.mxu0 0.0
        %2069 = vmatprep.subr.mxu0 0.0
        %2070 = vmatpush1.msra.mxu0 0.0
        %2071 = vmatprep.subr.mxu0 0.0
        %2072 = vmatpush1.msra.mxu0 0.0
        %2073 = vmatprep.subr.mxu0 0.0
        %2074 = vmatpush1.msra.mxu0 0.0
        %2075 = vmatprep.subr.mxu0 0.0
        %2076 = vmatpush1.msra.mxu0 0.0
        %2077 = vmatprep.subr.mxu0 0.0
        %2078 = vmatpush1.msra.mxu0 0.0
        %2079 = vmatprep.subr.mxu0 0.0
        %2080 = vmatpush1.msra.mxu0 0.0
        %2081 = vmatprep.subr.mxu0 0.0
        %2082 = vmatpush1.msra.mxu0 0.0
        %2083 = vmatprep.subr.mxu0 0.0
        %2084 = vmatpush1.msra.mxu0 0.0
        %2085 = vmatprep.subr.mxu0 0.0
        %2086 = vmatpush1.msra.mxu0 0.0
        %2087 = vmatprep.subr.mxu0 0.0
        %2088 = vmatpush1.msra.mxu0 0.0
        %2089 = vmatprep.subr.mxu0 0.0
        %2090 = vmatpush1.msra.mxu0 0.0
        %2091 = vmatprep.subr.mxu0 0.0
        %2092 = vmatpush1.msra.mxu0 0.0
        %2093 = vmatprep.subr.mxu0 0.0
        %2094 = vmatpush1.msra.mxu0 0.0
        %2095 = vmatprep.subr.mxu0 0.0
        %2096 = vmatpush1.msra.mxu0 0.0
        %2097 = vmatprep.subr.mxu0 0.0
        %2098 = vmatpush1.msra.mxu0 0.0
        %2099 = vmatprep.subr.mxu0 0.0
        %2100 = vmatpush1.msra.mxu0 0.0
        %2101 = vmatprep.subr.mxu0 0.0
        %2102 = vmatpush1.msra.mxu0 0.0
        %2103 = vmatprep.subr.mxu0 0.0
        %2104 = vmatpush1.msra.mxu0 0.0
        %2105 = vmatprep.subr.mxu0 0.0
        %2106 = vmatpush1.msra.mxu0 0.0
        %2107 = vmatprep.subr.mxu0 0.0
        %2108 = vmatpush1.msra.mxu0 0.0
        %2109 = vmatprep.mubr.f32.mxu0 0.0
        %2110 = vmatmul.mubr.f32.gmra.mrb[0].mxu0 %v2043
        %v2111 = vpop.f32.mrb[0].mxu0
        %v2112 = vadd.f32 0.0, %v2111
        %v2113 = vpop.f32.mrb[0].mxu0
        %2114 = vdwg.mxu0
        %s2115 = scalar_lea.vmem %s422, 24
        %v2116 = vld [vmem:[%s2115] sm:$0xff]
        %v2118 = vsel %vm549, %v2036, 0
        %v2121 = vsel %vm549, %v2112, 0
        %2123 = vmatprep.subr.mxu0 0.0
        %2124 = vmatpush1.msra.mxu0 %v2116
        %2125 = vmatprep.subr.mxu0 0.0
        %2126 = vmatpush1.msra.mxu0 0.0
        %2127 = vmatprep.subr.mxu0 0.0
        %2128 = vmatpush1.msra.mxu0 0.0
        %2129 = vmatprep.subr.mxu0 0.0
        %2130 = vmatpush1.msra.mxu0 0.0
        %2131 = vmatprep.subr.mxu0 0.0
        %2132 = vmatpush1.msra.mxu0 0.0
        %2133 = vmatprep.subr.mxu0 0.0
        %2134 = vmatpush1.msra.mxu0 0.0
        %2135 = vmatprep.subr.mxu0 0.0
        %2136 = vmatpush1.msra.mxu0 0.0
        %2137 = vmatprep.subr.mxu0 0.0
        %2138 = vmatpush1.msra.mxu0 0.0
        %2139 = vmatprep.subr.mxu0 0.0
        %2140 = vmatpush1.msra.mxu0 0.0
        %2141 = vmatprep.subr.mxu0 0.0
        %2142 = vmatpush1.msra.mxu0 0.0
        %2143 = vmatprep.subr.mxu0 0.0
        %2144 = vmatpush1.msra.mxu0 0.0
        %2145 = vmatprep.subr.mxu0 0.0
        %2146 = vmatpush1.msra.mxu0 0.0
        %2147 = vmatprep.subr.mxu0 0.0
        %2148 = vmatpush1.msra.mxu0 0.0
        %2149 = vmatprep.subr.mxu0 0.0
        %2150 = vmatpush1.msra.mxu0 0.0
        %2151 = vmatprep.subr.mxu0 0.0
        %2152 = vmatpush1.msra.mxu0 0.0
        %2153 = vmatprep.subr.mxu0 0.0
        %2154 = vmatpush1.msra.mxu0 0.0
        %2155 = vmatprep.subr.mxu0 0.0
        %2156 = vmatpush1.msra.mxu0 0.0
        %2157 = vmatprep.subr.mxu0 0.0
        %2158 = vmatpush1.msra.mxu0 0.0
        %2159 = vmatprep.subr.mxu0 0.0
        %2160 = vmatpush1.msra.mxu0 0.0
        %2161 = vmatprep.subr.mxu0 0.0
        %2162 = vmatpush1.msra.mxu0 0.0
        %2163 = vmatprep.subr.mxu0 0.0
        %2164 = vmatpush1.msra.mxu0 0.0
        %2165 = vmatprep.subr.mxu0 0.0
        %2166 = vmatpush1.msra.mxu0 0.0
        %2167 = vmatprep.subr.mxu0 0.0
        %2168 = vmatpush1.msra.mxu0 0.0
        %2169 = vmatprep.subr.mxu0 0.0
        %2170 = vmatpush1.msra.mxu0 0.0
        %2171 = vmatprep.subr.mxu0 0.0
        %2172 = vmatpush1.msra.mxu0 0.0
        %2173 = vmatprep.subr.mxu0 0.0
        %2174 = vmatpush1.msra.mxu0 0.0
        %2175 = vmatprep.subr.mxu0 0.0
        %2176 = vmatpush1.msra.mxu0 0.0
        %2177 = vmatprep.subr.mxu0 0.0
        %2178 = vmatpush1.msra.mxu0 0.0
        %2179 = vmatprep.subr.mxu0 0.0
        %2180 = vmatpush1.msra.mxu0 0.0
        %2181 = vmatprep.subr.mxu0 0.0
        %2182 = vmatpush1.msra.mxu0 0.0
        %2183 = vmatprep.subr.mxu0 0.0
        %2184 = vmatpush1.msra.mxu0 0.0
        %2185 = vmatprep.subr.mxu0 0.0
        %2186 = vmatpush1.msra.mxu0 0.0
        %2187 = vmatprep.mubr.f32.mxu0 0.0
        %2188 = vmatmul.mubr.f32.gmra.mrb[0].mxu0 %v2118
        %v2189 = vpop.f32.mrb[0].mxu0
        %v2190 = vadd.f32 0.0, %v2189
        %v2191 = vpop.f32.mrb[0].mxu0
        %2192 = vmatprep.mubr.f32.mxu0 0.0
        %2193 = vmatmul.mubr.f32.gmra.mrb[0].mxu0 %v2121
        %v2194 = vpop.f32.mrb[0].mxu0
        %v2195 = vadd.f32 0.0, %v2194
        %v2196 = vpop.f32.mrb[0].mxu0
        %2197 = vdwg.mxu0
        %v2198 = vadd.f32 %v1783, %v2190
        %v2199 = vadd.f32 %v1784, %v2195
        %v2200 = vlaneseq
        %v2201 = vshrl.u32 %v2200, 7
        %v2202 = vsub.s32 0, %v2201
        %v2203 = vrot.slane %v452, %v2202
        %v2204 = vadd.f32 %v2198, %v2203
        %v2205 = vadd.f32 %v2199, %v2203
        %v2206 = vadd.f32 %v450, %v2204
        %v2207 = vadd.f32 %v451, %v2205
        %v2208 = vsel %vm464, %v2206, 0.0
        %2209 = vadd.xlane.f32.xlu0 %v2208
        %v2210 = vpop.xlane.xlu0 %2209
        %v2211 = vsel %vm464, %v2207, 0.0
        %2212 = vadd.xlane.f32.xlu0 %v2211
        %v2213 = vpop.xlane.xlu0 %2212
        %v2214 = vrcp.pop 32.0
        %v2215 = vmul.f32 %v2210, %v2214
        %v2216 = vmul.f32 %v2213, %v2214
        %v2217 = vmul.f32 %v2206, %v2206
        %v2218 = vmul.f32 %v2207, %v2207
        %v2219 = vsel %vm464, %v2217, 0.0
        %2220 = vadd.xlane.f32.xlu0 %v2219
        %v2221 = vpop.xlane.xlu0 %2220
        %v2222 = vsel %vm464, %v2218, 0.0
        %2223 = vadd.xlane.f32.xlu0 %v2222
        %v2224 = vpop.xlane.xlu0 %2223
        %v2225 = vmul.f32 %v2221, %v2214
        %v2226 = vmul.f32 %v2224, %v2214
        %v2227 = vmul.f32 %v2215, %v2215
        %v2228 = vmul.f32 %v2216, %v2216
        %v2229 = vsub.f32 %v2225, %v2227
        %v2230 = vsub.f32 %v2226, %v2228
        %v2231 = vsub.f32 %v2206, %v2215
        %v2232 = vsub.f32 %v2207, %v2216
        %v2233 = vadd.f32 %v2229, 1e-05
        %v2234 = vadd.f32 %v2230, 1e-05
        %v2235 = vrsqrt.pop %v2233
        %v2236 = vrsqrt.pop %v2234
        %v2237 = vmul.f32 %v2231, %v2235
        %v2238 = vmul.f32 %v2232, %v2236
        %v2239 = vlaneseq
        %v2240 = vshrl.u32 %v2239, 7
        %v2241 = vsub.s32 1, %v2240
        %v2242 = vrot.slane %v452, %v2241
        %v2243 = vmul.f32 %v2237, %v2242
        %v2244 = vmul.f32 %v2238, %v2242
        %v2245 = vlaneseq
        %v2246 = vshrl.u32 %v2245, 7
        %v2247 = vsub.s32 2, %v2246
        %v2248 = vrot.slane %v452, %v2247
        %v2249 = vadd.f32 %v2243, %v2248
        %v2250 = vadd.f32 %v2244, %v2248
        %v2251 = vld [vmem:[%s427] sm:$0xff]
        %v2252 = vld [vmem:[%s427 + $0x8] sm:$0xff]
        %v2253 = vld [vmem:[%s427 + $0x10] sm:$0xff]
        %v2254 = vld [vmem:[%s427 + $0x18] sm:$0xff]
        %v2255 = vlaneseq
        %v2256 = vshrl.u32 %v2255, 7
        %v2257 = vsub.s32 3, %v2256
        %v2258 = vrot.slane %v452, %v2257
        %v2260 = vsel %vm464, %v2249, 0
        %v2263 = vsel %vm464, %v2250, 0
        %2265 = vmatprep.subr.mxu0 0.0
        %2266 = vmatpush1.msra.mxu0 %v2251
        %2267 = vmatprep.subr.mxu0 0.0
        %2268 = vmatpush1.msra.mxu0 %v2252
        %2269 = vmatprep.subr.mxu0 0.0
        %2270 = vmatpush1.msra.mxu0 %v2253
        %2271 = vmatprep.subr.mxu0 0.0
        %2272 = vmatpush1.msra.mxu0 %v2254
        %2273 = vmatprep.subr.mxu0 0.0
        %2274 = vmatpush1.msra.mxu0 0.0
        %2275 = vmatprep.subr.mxu0 0.0
        %2276 = vmatpush1.msra.mxu0 0.0
        %2277 = vmatprep.subr.mxu0 0.0
        %2278 = vmatpush1.msra.mxu0 0.0
        %2279 = vmatprep.subr.mxu0 0.0
        %2280 = vmatpush1.msra.mxu0 0.0
        %2281 = vmatprep.subr.mxu0 0.0
        %2282 = vmatpush1.msra.mxu0 0.0
        %2283 = vmatprep.subr.mxu0 0.0
        %2284 = vmatpush1.msra.mxu0 0.0
        %2285 = vmatprep.subr.mxu0 0.0
        %2286 = vmatpush1.msra.mxu0 0.0
        %2287 = vmatprep.subr.mxu0 0.0
        %2288 = vmatpush1.msra.mxu0 0.0
        %2289 = vmatprep.subr.mxu0 0.0
        %2290 = vmatpush1.msra.mxu0 0.0
        %2291 = vmatprep.subr.mxu0 0.0
        %2292 = vmatpush1.msra.mxu0 0.0
        %2293 = vmatprep.subr.mxu0 0.0
        %2294 = vmatpush1.msra.mxu0 0.0
        %2295 = vmatprep.subr.mxu0 0.0
        %2296 = vmatpush1.msra.mxu0 0.0
        %2297 = vmatprep.subr.mxu0 0.0
        %2298 = vmatpush1.msra.mxu0 0.0
        %2299 = vmatprep.subr.mxu0 0.0
        %2300 = vmatpush1.msra.mxu0 0.0
        %2301 = vmatprep.subr.mxu0 0.0
        %2302 = vmatpush1.msra.mxu0 0.0
        %2303 = vmatprep.subr.mxu0 0.0
        %2304 = vmatpush1.msra.mxu0 0.0
        %2305 = vmatprep.subr.mxu0 0.0
        %2306 = vmatpush1.msra.mxu0 0.0
        %2307 = vmatprep.subr.mxu0 0.0
        %2308 = vmatpush1.msra.mxu0 0.0
        %2309 = vmatprep.subr.mxu0 0.0
        %2310 = vmatpush1.msra.mxu0 0.0
        %2311 = vmatprep.subr.mxu0 0.0
        %2312 = vmatpush1.msra.mxu0 0.0
        %2313 = vmatprep.subr.mxu0 0.0
        %2314 = vmatpush1.msra.mxu0 0.0
        %2315 = vmatprep.subr.mxu0 0.0
        %2316 = vmatpush1.msra.mxu0 0.0
        %2317 = vmatprep.subr.mxu0 0.0
        %2318 = vmatpush1.msra.mxu0 0.0
        %2319 = vmatprep.subr.mxu0 0.0
        %2320 = vmatpush1.msra.mxu0 0.0
        %2321 = vmatprep.subr.mxu0 0.0
        %2322 = vmatpush1.msra.mxu0 0.0
        %2323 = vmatprep.subr.mxu0 0.0
        %2324 = vmatpush1.msra.mxu0 0.0
        %2325 = vmatprep.subr.mxu0 0.0
        %2326 = vmatpush1.msra.mxu0 0.0
        %2327 = vmatprep.subr.mxu0 0.0
        %2328 = vmatpush1.msra.mxu0 0.0
        %2329 = vmatprep.mubr.f32.mxu0 0.0
        %2330 = vmatmul.mubr.f32.gmra.mrb[0].mxu0 %v2260
        %v2331 = vpop.f32.mrb[0].mxu0
        %v2332 = vadd.f32 %v2258, %v2331
        %v2333 = vpop.f32.mrb[0].mxu0
        %2334 = vmatprep.mubr.f32.mxu0 0.0
        %2335 = vmatmul.mubr.f32.gmra.mrb[0].mxu0 %v2263
        %v2336 = vpop.f32.mrb[0].mxu0
        %v2337 = vadd.f32 %v2258, %v2336
        %v2338 = vpop.f32.mrb[0].mxu0
        %2339 = vdwg.mxu0
        %v2340 = vmax.f32 %v2332, 0.0
        %v2341 = vmax.f32 %v2337, 0.0
        %v2342 = vld [vmem:[%s432] sm:$0xff]
        %v2343 = vld [vmem:[%s432 + $0x8] sm:$0xff]
        %v2344 = vld [vmem:[%s432 + $0x10] sm:$0xff]
        %v2345 = vld [vmem:[%s432 + $0x18] sm:$0xff]
        %v2346 = vld [vmem:[%s432 + $0x20] sm:$0xff]
        %v2347 = vld [vmem:[%s432 + $0x28] sm:$0xff]
        %v2348 = vld [vmem:[%s432 + $0x30] sm:$0xff]
        %v2349 = vld [vmem:[%s432 + $0x38] sm:$0xff]
        %v2350 = vlaneseq
        %v2351 = vshrl.u32 %v2350, 7
        %v2352 = vsub.s32 4, %v2351
        %v2353 = vrot.slane %v452, %v2352
        %vm2354 = vcmask 523264
        %v2356 = vsel %vm2354, %v2340, 0
        %v2359 = vsel %vm2354, %v2341, 0
        %2361 = vmatprep.subr.mxu0 0.0
        %2362 = vmatpush1.msra.mxu0 %v2342
        %2363 = vmatprep.subr.mxu0 0.0
        %2364 = vmatpush1.msra.mxu0 %v2343
        %2365 = vmatprep.subr.mxu0 0.0
        %2366 = vmatpush1.msra.mxu0 %v2344
        %2367 = vmatprep.subr.mxu0 0.0
        %2368 = vmatpush1.msra.mxu0 %v2345
        %2369 = vmatprep.subr.mxu0 0.0
        %2370 = vmatpush1.msra.mxu0 %v2346
        %2371 = vmatprep.subr.mxu0 0.0
        %2372 = vmatpush1.msra.mxu0 %v2347
        %2373 = vmatprep.subr.mxu0 0.0
        %2374 = vmatpush1.msra.mxu0 %v2348
        %2375 = vmatprep.subr.mxu0 0.0
        %2376 = vmatpush1.msra.mxu0 %v2349
        %2377 = vmatprep.subr.mxu0 0.0
        %2378 = vmatpush1.msra.mxu0 0.0
        %2379 = vmatprep.subr.mxu0 0.0
        %2380 = vmatpush1.msra.mxu0 0.0
        %2381 = vmatprep.subr.mxu0 0.0
        %2382 = vmatpush1.msra.mxu0 0.0
        %2383 = vmatprep.subr.mxu0 0.0
        %2384 = vmatpush1.msra.mxu0 0.0
        %2385 = vmatprep.subr.mxu0 0.0
        %2386 = vmatpush1.msra.mxu0 0.0
        %2387 = vmatprep.subr.mxu0 0.0
        %2388 = vmatpush1.msra.mxu0 0.0
        %2389 = vmatprep.subr.mxu0 0.0
        %2390 = vmatpush1.msra.mxu0 0.0
        %2391 = vmatprep.subr.mxu0 0.0
        %2392 = vmatpush1.msra.mxu0 0.0
        %2393 = vmatprep.subr.mxu0 0.0
        %2394 = vmatpush1.msra.mxu0 0.0
        %2395 = vmatprep.subr.mxu0 0.0
        %2396 = vmatpush1.msra.mxu0 0.0
        %2397 = vmatprep.subr.mxu0 0.0
        %2398 = vmatpush1.msra.mxu0 0.0
        %2399 = vmatprep.subr.mxu0 0.0
        %2400 = vmatpush1.msra.mxu0 0.0
        %2401 = vmatprep.subr.mxu0 0.0
        %2402 = vmatpush1.msra.mxu0 0.0
        %2403 = vmatprep.subr.mxu0 0.0
        %2404 = vmatpush1.msra.mxu0 0.0
        %2405 = vmatprep.subr.mxu0 0.0
        %2406 = vmatpush1.msra.mxu0 0.0
        %2407 = vmatprep.subr.mxu0 0.0
        %2408 = vmatpush1.msra.mxu0 0.0
        %2409 = vmatprep.subr.mxu0 0.0
        %2410 = vmatpush1.msra.mxu0 0.0
        %2411 = vmatprep.subr.mxu0 0.0
        %2412 = vmatpush1.msra.mxu0 0.0
        %2413 = vmatprep.subr.mxu0 0.0
        %2414 = vmatpush1.msra.mxu0 0.0
        %2415 = vmatprep.subr.mxu0 0.0
        %2416 = vmatpush1.msra.mxu0 0.0
        %2417 = vmatprep.subr.mxu0 0.0
        %2418 = vmatpush1.msra.mxu0 0.0
        %2419 = vmatprep.subr.mxu0 0.0
        %2420 = vmatpush1.msra.mxu0 0.0
        %2421 = vmatprep.subr.mxu0 0.0
        %2422 = vmatpush1.msra.mxu0 0.0
        %2423 = vmatprep.subr.mxu0 0.0
        %2424 = vmatpush1.msra.mxu0 0.0
        %2425 = vmatprep.mubr.f32.mxu0 0.0
        %2426 = vmatmul.mubr.f32.gmra.mrb[0].mxu0 %v2356
        %v2427 = vpop.f32.mrb[0].mxu0
        %v2428 = vadd.f32 %v2353, %v2427
        %v2429 = vpop.f32.mrb[0].mxu0
        %2430 = vmatprep.mubr.f32.mxu0 0.0
        %2431 = vmatmul.mubr.f32.gmra.mrb[0].mxu0 %v2359
        %v2432 = vpop.f32.mrb[0].mxu0
        %v2433 = vadd.f32 %v2353, %v2432
        %v2434 = vpop.f32.mrb[0].mxu0
        %2435 = vdwg.mxu0
        %v2436 = vadd.f32 %v2249, %v2428
        %v2437 = vadd.f32 %v2250, %v2433
        %v2438 = vsel %vm464, %v2436, 0.0
        %2439 = vadd.xlane.f32.xlu0 %v2438
        %v2440 = vpop.xlane.xlu0 %2439
        %v2441 = vsel %vm464, %v2437, 0.0
        %2442 = vadd.xlane.f32.xlu0 %v2441
        %v2443 = vpop.xlane.xlu0 %2442
        %v2444 = vmul.f32 %v2440, %v2214
        %v2445 = vmul.f32 %v2443, %v2214
        %v2446 = vmul.f32 %v2436, %v2436
        %v2447 = vmul.f32 %v2437, %v2437
        %v2448 = vsel %vm464, %v2446, 0.0
        %2449 = vadd.xlane.f32.xlu0 %v2448
        %v2450 = vpop.xlane.xlu0 %2449
        %v2451 = vsel %vm464, %v2447, 0.0
        %2452 = vadd.xlane.f32.xlu0 %v2451
        %v2453 = vpop.xlane.xlu0 %2452
        %v2454 = vmul.f32 %v2450, %v2214
        %v2455 = vmul.f32 %v2453, %v2214
        %v2456 = vmul.f32 %v2444, %v2444
        %v2457 = vmul.f32 %v2445, %v2445
        %v2458 = vsub.f32 %v2454, %v2456
        %v2459 = vsub.f32 %v2455, %v2457
        %v2460 = vsub.f32 %v2436, %v2444
        %v2461 = vsub.f32 %v2437, %v2445
        %v2462 = vadd.f32 %v2458, 1e-05
        %v2463 = vadd.f32 %v2459, 1e-05
        %v2464 = vrsqrt.pop %v2462
        %v2465 = vrsqrt.pop %v2463
        %v2466 = vmul.f32 %v2460, %v2464
        %v2467 = vmul.f32 %v2461, %v2465
        %v2468 = vlaneseq
        %v2469 = vshrl.u32 %v2468, 7
        %v2470 = vsub.s32 5, %v2469
        %v2471 = vrot.slane %v452, %v2470
        %v2472 = vmul.f32 %v2466, %v2471
        %v2473 = vmul.f32 %v2467, %v2471
        %v2474 = vlaneseq
        %v2475 = vshrl.u32 %v2474, 7
        %v2476 = vsub.s32 6, %v2475
        %v2477 = vrot.slane %v452, %v2476
        %v2478 = vadd.f32 %v2472, %v2477
        %v2479 = vadd.f32 %v2473, %v2477
        %2480 = vst.msk [vmem:[#allocation7] sm:$0xff] %vm464, %v2478
        %2481 = vst.msk [vmem:[#allocation7 + $0x8] sm:$0xff] %vm464, %v2479
        // Predicated region
        $region65: #{tpu_custom_call.1} parent=51 // pred_check
          %p2482 = pneg %p255
        $region66: #{tpu_custom_call.1} parent=51 // pred_check_branch
          %2484 = sbr.rel (%p2482) target = $region68
        $region67: #{tpu_custom_call.1} parent=51 // pred_region
          %s2485 = smul.u32 2, %s26
          %s2487 = ssub.s32 256, 256
          %2488 = vsyncadd [#allocation4], %s2487
          %s2489 = smul.addr %s2485, 128
          %s2490 = scalar_lea.hbm %s8, %s2489
          %s2491 = sshll.u32 [#allocation7], 4
          %s2492 = int_to_ptr.vmem [resolvable:$true] %s2491
          %2497 = dma.vmem_to_hbm [thread:$0]  %s2492, 256, %s2490, [#allocation4], 128, 128, 8
        $region68: #{tpu_custom_call.1} parent=51 // pred_fallthru
          _
        // Predicated region
        $region69: #{tpu_custom_call.1} parent=51 // pred_check
          %p2498 = pneg %p255
        $region70: #{tpu_custom_call.1} parent=51 // pred_check_branch
          %2500 = sbr.rel (%p2498) target = $region72
        $region71: #{tpu_custom_call.1} parent=51 // pred_region
          %2501 = dma.done [#allocation4], 256
        $region72: #{tpu_custom_call.1} parent=51 // pred_fallthru
          _
      $region52: #{tpu_custom_call.1} parent=5 // pred_fallthru
        _
      %p2502 = scmp.le.s32.totalorder 2, %s17
      // Predicated region
      $region73: #{tpu_custom_call.1} parent=5 // pred_check
        %p2503 = pneg %p2502
      $region74: #{tpu_custom_call.1} parent=5 // pred_check_branch
        %2505 = sbr.rel (%p2503) target = $region76
      $region75: #{tpu_custom_call.1} parent=5 // pred_region
        %s2506 = ssub.s32 %s17, 2
      $region76: #{tpu_custom_call.1} parent=5 // pred_fallthru
        _
    $region6: #{tpu_custom_call.1} parent=1 // loop_footer
      %s21 = sadd.s32 1, %s17
    $region7: #{tpu_custom_call.1} parent=1 // loop_footer_branch
      %16 = sbr.rel target = $region3
    $region8: #{tpu_custom_call.1} parent=1 // loop_exit
      _
    %2507 = vsyncpa [#allocation3], 1
    %s2508 = scalar_lea.sflag [#allocation3], 1
    %2509 = vsyncpa %s2508, 1
    %2510 = vsyncpa [#allocation6], 1
    %2511 = vsyncpa [#allocation4], 1
    %s2512 = scalar_lea.sflag [#allocation4], 1
    %2513 = vsyncpa %s2512, 1

</llo_original>
